<compile_context>
chip_gen: v7x
topology: tpu7x:2x2x1
jax: 0.10.0
libtpu: 0.0.40
codegen_flags: <defaults>
</compile_context>

<pallas_src>
import functools

import jax
import jax.numpy as jnp
from jax.experimental import pallas as pl
from jax.experimental.pallas import tpu as pltpu  # noqa: F401  (kept for optional compiler params)

# ----- model hyperparameters (small, consistent with the module) -----
B = 2
T_DEC = 8            # context_size
T_ENC = 8
D_ENC = 32           # in_enc_dim
D_DEC = 32           # in_dec_dim
QK_DIM = 8
NUM_HEADS = 4
HID = QK_DIM * NUM_HEADS      # 32
FF_DIM = 4 * D_DEC            # 128
LN_EPS = 1e-5
NEG_BIG = -1e30               # large finite negative for masking (avoids inf-inf NaNs)


def _layernorm(x, g, b):
    mu = jnp.mean(x, axis=-1, keepdims=True)
    xc = x - mu
    var = jnp.mean(xc * xc, axis=-1, keepdims=True)
    return xc * jax.lax.rsqrt(var + LN_EPS) * g + b


def _mha(q, k, vo, bp_eff, mask, num_heads, qk_dim, d_out):
    """Multi-head attention with V/output projections pre-folded.

    q, k   : (Nq, H*QK) / (Nk, H*QK); q already scaled by 1/sqrt(QK).
    vo     : (Nk, H*d_out) = x_kv @ W_vo, with W_vo_h = wv_h @ wp_h (lane-dense).
    bp_eff : (1, d_out) = proj bias + bv @ wp (fold valid since softmax rows sum to 1).
    mask   : (Nq, Nk) additive mask (0 / NEG_BIG), shared by all heads.
    """
    out = bp_eff                                   # (1, d_out) broadcasts on first add
    for h in range(num_heads):
        sl = slice(h * qk_dim, (h + 1) * qk_dim)
        # score = q_h @ k_h^T without materializing a transpose (NT dot_general)
        s = jax.lax.dot_general(
            q[:, sl], k[:, sl],
            dimension_numbers=(((1,), (1,)), ((), ())),
            preferred_element_type=jnp.float32) + mask
        m = jnp.max(s, axis=-1, keepdims=True)
        e = jnp.exp(s - m)
        # TODO(synk): dropout on attention weights / projections omitted (eval mode).
        p = e * pl.reciprocal(jnp.sum(e, axis=-1, keepdims=True), approx=True)
        out = out + jnp.dot(p, vo[:, h * d_out:(h + 1) * d_out],
                            preferred_element_type=jnp.float32)
    return out


def decoder_kernel(x_enc_ref, x_dec_ref, w_ref, out_ref,
                   *, t_dec, t_enc, num_heads, qk_dim):
    n_dec, d_dec = x_dec_ref.shape        # (B*T_dec, D_DEC)
    n_enc, d_enc = x_enc_ref.shape        # (B*T_enc, D_ENC)
    d = d_dec
    hid = num_heads * qk_dim
    log2_t_dec = t_dec.bit_length() - 1
    log2_t_enc = t_enc.bit_length() - 1

    x_dec = x_dec_ref[...]
    x_enc = x_enc_ref[...]

    # ---- unpack the single weight slab with static, sublane-aligned slices ----
    r = 0
    qk_w = w_ref[r:r + d_dec, :]; r += d_dec     # [sa_wq*s | sa_wk | ca_wq*s | ca_wk]
    sa_wvo = w_ref[r:r + d_dec, :]; r += d_dec   # folded V@proj, self-attn  (32,128)
    ca_wvo = w_ref[r:r + d_enc, :]; r += d_enc   # folded V@proj, cross-attn (32,128)
    ff_w1 = w_ref[r:r + d_dec, :]; r += d_dec    # (32,128)
    ff_w2t = w_ref[r:r + d_dec, :]; r += d_dec   # ff_w2 transposed: (32,128)
    bias = w_ref[r:r + 8, :]                     # aligned 8-row bias/LN block
    b_qk = bias[0:1, :]                          # [sa_bq*s | sa_bk | ca_bq*s | ca_bk]
    b_p = bias[1:2, :]                           # [sa_bp_eff | ca_bp_eff | ff_b2 | 0]
    ff_b1 = bias[2:3, :]                         # (1,128)
    ln_a = bias[3:4, :]                          # [ln1_g | ln1_b | ln2_g | ln2_b]
    ln_c = bias[4:5, :]                          # [ln3_g | ln3_b | 0 | 0]

    ln1_g, ln1_b = ln_a[:, 0:d], ln_a[:, d:2 * d]
    ln2_g, ln2_b = ln_a[:, 2 * d:3 * d], ln_a[:, 3 * d:4 * d]
    ln3_g, ln3_b = ln_c[:, 0:d], ln_c[:, d:2 * d]

    # ---- additive masks, built once and shared by all heads ----
    #   self-attn : causal within each batch element, blocked across elements
    #   cross-attn: block-diagonal (decoder rows attend only to their own batch)
    rows = jax.lax.broadcasted_iota(jnp.int32, (n_dec, n_dec), 0)
    cols = jax.lax.broadcasted_iota(jnp.int32, (n_dec, n_dec), 1)
    same_b = jnp.right_shift(rows, log2_t_dec) == jnp.right_shift(cols, log2_t_dec)
    sa_mask = jnp.where(same_b & (cols <= rows), 0.0, NEG_BIG).astype(jnp.float32)

    rows_c = jax.lax.broadcasted_iota(jnp.int32, (n_dec, n_enc), 0)
    cols_c = jax.lax.broadcasted_iota(jnp.int32, (n_dec, n_enc), 1)
    ca_mask = jnp.where(
        jnp.right_shift(rows_c, log2_t_dec) == jnp.right_shift(cols_c, log2_t_enc),
        0.0, NEG_BIG).astype(jnp.float32)

    # ---- x = x_dec + SA(LN1(x_dec))   (causal) ----
    h1 = _layernorm(x_dec, ln1_g, ln1_b)
    # one full-128-lane matmul; only the first 2*hid columns (self-attn Q|K) are used
    qk_full = jnp.dot(h1, qk_w, preferred_element_type=jnp.float32) + b_qk
    vo_sa = jnp.dot(h1, sa_wvo, preferred_element_type=jnp.float32)      # (n_dec, 128)
    x = x_dec + _mha(qk_full[:, 0:hid], qk_full[:, hid:2 * hid], vo_sa,
                     b_p[:, 0:d], sa_mask, num_heads, qk_dim, d)

    # ---- x = x + CA(x_enc, LN2(x)) ----
    h2 = _layernorm(x, ln2_g, ln2_b)
    q_ca = (jnp.dot(h2, qk_w[:, 2 * hid:3 * hid], preferred_element_type=jnp.float32)
            + b_qk[:, 2 * hid:3 * hid])
    k_ca = (jnp.dot(x_enc, qk_w[:, 3 * hid:4 * hid], preferred_element_type=jnp.float32)
            + b_qk[:, 3 * hid:4 * hid])
    vo_ca = jnp.dot(x_enc, ca_wvo, preferred_element_type=jnp.float32)   # (n_enc, 128)
    x = x + _mha(q_ca, k_ca, vo_ca, b_p[:, d:2 * d], ca_mask, num_heads, qk_dim, d)

    # ---- x = x + FFN(LN3(x)) ----
    h3 = _layernorm(x, ln3_g, ln3_b)
    ff = jnp.maximum(
        jnp.dot(h3, ff_w1, preferred_element_type=jnp.float32) + ff_b1, 0.0)
    ff2 = jax.lax.dot_general(                      # ff @ ff_w2  via transposed operand
        ff, ff_w2t, dimension_numbers=(((1,), (1,)), ((), ())),
        preferred_element_type=jnp.float32) + b_p[:, 2 * d:3 * d]

    out_ref[...] = (x + ff2).astype(out_ref.dtype)


@jax.jit
def decoder_forward(x_enc, x_dec, params):
    b, t_dec, d_dec = x_dec.shape
    _, t_enc, d_enc = x_enc.shape
    assert d_enc == d_dec, "slab packing assumes in_enc_dim == in_dec_dim"
    assert (t_dec & (t_dec - 1) == 0) and (t_enc & (t_enc - 1) == 0), \
        "batch-folded masks assume power-of-two sequence lengths"

    # --- parameter prep (runs in XLA outside the kernel) ---
    scale = QK_DIM ** (-0.5)

    def fold_vo(wv, wp):
        # W_vo = concat_h( wv_h @ wp_h ), shape (D_in, NUM_HEADS * d_dec) = (32, 128)
        parts = [wv[:, h * QK_DIM:(h + 1) * QK_DIM] @ wp[h * QK_DIM:(h + 1) * QK_DIM, :]
                 for h in range(NUM_HEADS)]
        return jnp.concatenate(parts, axis=1)

    sa_wvo = fold_vo(params["sa_wv"], params["sa_wp"])
    ca_wvo = fold_vo(params["ca_wv"], params["ca_wp"])
    # V bias folded into proj bias (exact because softmax rows sum to 1)
    sa_bp_eff = params["sa_bp"] + params["sa_bv"] @ params["sa_wp"]
    ca_bp_eff = params["ca_bp"] + params["ca_bv"] @ params["ca_wp"]

    qk_w = jnp.concatenate([params["sa_wq"] * scale, params["sa_wk"],
                            params["ca_wq"] * scale, params["ca_wk"]], axis=1)   # (32,128)
    b_qk = jnp.concatenate([params["sa_bq"] * scale, params["sa_bk"],
                            params["ca_bq"] * scale, params["ca_bk"]], axis=1)   # (1,128)
    zero_d = jnp.zeros((1, d_dec), jnp.float32)
    b_p = jnp.concatenate([sa_bp_eff, ca_bp_eff, params["ff_b2"], zero_d], axis=1)
    ln_a = jnp.concatenate([params["ln1_g"], params["ln1_b"],
                            params["ln2_g"], params["ln2_b"]], axis=1)
    ln_c = jnp.concatenate([params["ln3_g"], params["ln3_b"], zero_d, zero_d], axis=1)

    # One contiguous (168, 128) weight slab  ->  a single HBM->VMEM DMA.
    slab = jnp.concatenate([
        qk_w,                                  # rows   0: 32
        sa_wvo,                                # rows  32: 64
        ca_wvo,                                # rows  64: 96
        params["ff_w1"],                       # rows  96:128
        params["ff_w2"].T,                     # rows 128:160
        b_qk, b_p, params["ff_b1"], ln_a, ln_c,      # rows 160:165
        jnp.zeros((3, 4 * HID), jnp.float32),        # pad to 168 rows (multiple of 8)
    ], axis=0)

    # Fold batch into rows: whole problem fits in VMEM -> single grid step.
    x_enc2 = x_enc.reshape(b * t_enc, d_enc)
    x_dec2 = x_dec.reshape(b * t_dec, d_dec)

    kernel = functools.partial(
        decoder_kernel, t_dec=t_dec, t_enc=t_enc,
        num_heads=NUM_HEADS, qk_dim=QK_DIM)

    out2 = pl.pallas_call(
        kernel,
        out_shape=jax.ShapeDtypeStruct((b * t_dec, d_dec), x_dec.dtype),
    )(x_enc2, x_dec2, slab)
    return out2.reshape(b, t_dec, d_dec)


# ------------------- pure-JAX reference for sanity check -------------------
def _ref_ln(x, g, b):
    mu = jnp.mean(x, axis=-1, keepdims=True)
    var = jnp.mean((x - mu) ** 2, axis=-1, keepdims=True)
    return (x - mu) / jnp.sqrt(var + LN_EPS) * g + b


def _ref_mha(xq, xkv, wq, bq, wk, bk, wv, bv, wp, bp, causal):
    bsz, tq, _ = xq.shape
    tk = xkv.shape[1]
    q = (xq @ wq + bq).reshape(bsz, tq, NUM_HEADS, QK_DIM).transpose(0, 2, 1, 3)
    k = (xkv @ wk + bk).reshape(bsz, tk, NUM_HEADS, QK_DIM).transpose(0, 2, 1, 3)
    v = (xkv @ wv + bv).reshape(bsz, tk, NUM_HEADS, QK_DIM).transpose(0, 2, 1, 3)
    att = jnp.einsum("bhqd,bhkd->bhqk", q, k) * (QK_DIM ** -0.5)
    if causal:
        mask = jnp.triu(jnp.ones((tq, tk), bool), k=1)
        att = jnp.where(mask, -jnp.inf, att)
    att = jax.nn.softmax(att, axis=-1)
    o = jnp.einsum("bhqk,bhkd->bhqd", att, v).transpose(0, 2, 1, 3).reshape(bsz, tq, -1)
    return o @ wp + bp


def _ref_decoder(x_enc, x_dec, p):
    h1 = _ref_ln(x_dec, p["ln1_g"], p["ln1_b"])
    x = x_dec + _ref_mha(h1, h1,
                         p["sa_wq"], p["sa_bq"], p["sa_wk"], p["sa_bk"],
                         p["sa_wv"], p["sa_bv"], p["sa_wp"], p["sa_bp"], True)
    h2 = _ref_ln(x, p["ln2_g"], p["ln2_b"])
    x = x + _ref_mha(h2, x_enc,
                     p["ca_wq"], p["ca_bq"], p["ca_wk"], p["ca_bk"],
                     p["ca_wv"], p["ca_bv"], p["ca_wp"], p["ca_bp"], False)
    h3 = _ref_ln(x, p["ln3_g"], p["ln3_b"])
    ff = jnp.maximum(h3 @ p["ff_w1"] + p["ff_b1"], 0.0) @ p["ff_w2"] + p["ff_b2"]
    return x + ff


def _init_params(key):
    ks = jax.random.split(key, 32)
    it = iter(range(32))

    def w(shape, k):
        return (jax.random.normal(ks[k], shape, jnp.float32) * 0.05).astype(jnp.float32)

    return {
        # self-attention (weights stored as (in, out); biases as (1, out))
        "sa_wq": w((D_DEC, HID), next(it)), "sa_bq": w((1, HID), next(it)),
        "sa_wk": w((D_DEC, HID), next(it)), "sa_bk": w((1, HID), next(it)),
        "sa_wv": w((D_DEC, HID), next(it)), "sa_bv": w((1, HID), next(it)),
        "sa_wp": w((HID, D_DEC), next(it)), "sa_bp": w((1, D_DEC), next(it)),
        "ln1_g": jnp.ones((1, D_DEC), jnp.float32),
        "ln1_b": jnp.zeros((1, D_DEC), jnp.float32),
        # cross-attention
        "ca_wq": w((D_DEC, HID), next(it)), "ca_bq": w((1, HID), next(it)),
        "ca_wk": w((D_ENC, HID), next(it)), "ca_bk": w((1, HID), next(it)),
        "ca_wv": w((D_ENC, HID), next(it)), "ca_bv": w((1, HID), next(it)),
        "ca_wp": w((HID, D_DEC), next(it)), "ca_bp": w((1, D_DEC), next(it)),
        "ln2_g": jnp.ones((1, D_DEC), jnp.float32),
        "ln2_b": jnp.zeros((1, D_DEC), jnp.float32),
        # feed-forward
        "ff_w1": w((D_DEC, FF_DIM), next(it)), "ff_b1": w((1, FF_DIM), next(it)),
        "ff_w2": w((FF_DIM, D_DEC), next(it)), "ff_b2": w((1, D_DEC), next(it)),
        "ln3_g": jnp.ones((1, D_DEC), jnp.float32),
        "ln3_b": jnp.zeros((1, D_DEC), jnp.float32),
    }


if __name__ == "__main__":
    key = jax.random.PRNGKey(0)
    k_enc, k_dec, k_par = jax.random.split(key, 3)
    x_enc = jax.random.normal(k_enc, (B, T_ENC, D_ENC), jnp.float32)
    x_dec = jax.random.normal(k_dec, (B, T_DEC, D_DEC), jnp.float32)
    params = _init_params(k_par)

    out = jax.block_until_ready(decoder_forward(x_enc, x_dec, params))

    ref = _ref_decoder(x_enc, x_dec, params)
    assert out.shape == (B, T_DEC, D_DEC)
    # tolerance slightly loosened vs exact-f32: softmax divide uses the EUP
    # approximate reciprocal (pl.reciprocal(approx=True))
    assert jnp.allclose(out, ref, atol=1e-3, rtol=1e-3), (
        float(jnp.max(jnp.abs(out - ref))))

    print("KERNEL_OK")
</pallas_src>

<mosaic_0001>
module attributes {stable_mosaic.version = 11 : i64} {
  func.func @decoder_kernel(%arg0: memref<16x32xf32, #tpu.memory_space<vmem>>, %arg1: memref<16x32xf32, #tpu.memory_space<vmem>>, %arg2: memref<168x128xf32, #tpu.memory_space<vmem>>, %arg3: memref<16x32xf32, #tpu.memory_space<vmem>>) attributes {dimension_semantics = [], scalar_prefetch = 0 : i64, scratch_operands = 0 : i64, tpu.core_type = #tpu.core_type<tc>} {
    %c0 = arith.constant 0 : index
    %c0_0 = arith.constant 0 : index
    %0 = vector.load %arg1[%c0, %c0_0] : memref<16x32xf32, #tpu.memory_space<vmem>>, vector<16x32xf32>
    %c0_1 = arith.constant 0 : index
    %c0_2 = arith.constant 0 : index
    %1 = vector.load %arg0[%c0_1, %c0_2] : memref<16x32xf32, #tpu.memory_space<vmem>>, vector<16x32xf32>
    %c0_3 = arith.constant 0 : index
    %c0_4 = arith.constant 0 : index
    %2 = vector.load %arg2[%c0_3, %c0_4] : memref<168x128xf32, #tpu.memory_space<vmem>>, vector<32x128xf32>
    %c32 = arith.constant 32 : index
    %c0_5 = arith.constant 0 : index
    %3 = vector.load %arg2[%c32, %c0_5] : memref<168x128xf32, #tpu.memory_space<vmem>>, vector<32x128xf32>
    %c64 = arith.constant 64 : index
    %c0_6 = arith.constant 0 : index
    %4 = vector.load %arg2[%c64, %c0_6] : memref<168x128xf32, #tpu.memory_space<vmem>>, vector<32x128xf32>
    %c96 = arith.constant 96 : index
    %c0_7 = arith.constant 0 : index
    %5 = vector.load %arg2[%c96, %c0_7] : memref<168x128xf32, #tpu.memory_space<vmem>>, vector<32x128xf32>
    %c128 = arith.constant 128 : index
    %c0_8 = arith.constant 0 : index
    %6 = vector.load %arg2[%c128, %c0_8] : memref<168x128xf32, #tpu.memory_space<vmem>>, vector<32x128xf32>
    %c160 = arith.constant 160 : index
    %c0_9 = arith.constant 0 : index
    %7 = vector.load %arg2[%c160, %c0_9] : memref<168x128xf32, #tpu.memory_space<vmem>>, vector<8x128xf32>
    %8 = vector.extract_strided_slice %7 {offsets = [0, 0], sizes = [1, 128], strides = [1, 1]} : vector<8x128xf32> to vector<1x128xf32>
    %9 = vector.extract_strided_slice %7 {offsets = [1, 0], sizes = [1, 128], strides = [1, 1]} : vector<8x128xf32> to vector<1x128xf32>
    %10 = vector.extract_strided_slice %7 {offsets = [2, 0], sizes = [1, 128], strides = [1, 1]} : vector<8x128xf32> to vector<1x128xf32>
    %11 = vector.extract_strided_slice %7 {offsets = [3, 0], sizes = [1, 128], strides = [1, 1]} : vector<8x128xf32> to vector<1x128xf32>
    %12 = vector.extract_strided_slice %7 {offsets = [4, 0], sizes = [1, 128], strides = [1, 1]} : vector<8x128xf32> to vector<1x128xf32>
    %13 = vector.extract_strided_slice %11 {offsets = [0, 0], sizes = [1, 32], strides = [1, 1]} : vector<1x128xf32> to vector<1x32xf32>
    %14 = vector.extract_strided_slice %11 {offsets = [0, 32], sizes = [1, 32], strides = [1, 1]} : vector<1x128xf32> to vector<1x32xf32>
    %15 = vector.extract_strided_slice %11 {offsets = [0, 64], sizes = [1, 32], strides = [1, 1]} : vector<1x128xf32> to vector<1x32xf32>
    %16 = vector.extract_strided_slice %11 {offsets = [0, 96], sizes = [1, 32], strides = [1, 1]} : vector<1x128xf32> to vector<1x32xf32>
    %17 = vector.extract_strided_slice %12 {offsets = [0, 0], sizes = [1, 32], strides = [1, 1]} : vector<1x128xf32> to vector<1x32xf32>
    %18 = vector.extract_strided_slice %12 {offsets = [0, 32], sizes = [1, 32], strides = [1, 1]} : vector<1x128xf32> to vector<1x32xf32>
    %19 = tpu.iota {dimensions = array<i32: 0>} : vector<16x16xi32>
    %20 = tpu.iota {dimensions = array<i32: 1>} : vector<16x16xi32>
    %c3_i32 = arith.constant 3 : i32
    %21 = vector.broadcast %c3_i32 : i32 to vector<16x16xi32>
    %22 = arith.shrsi %19, %21 : vector<16x16xi32>
    %c3_i32_10 = arith.constant 3 : i32
    %23 = vector.broadcast %c3_i32_10 : i32 to vector<16x16xi32>
    %24 = arith.shrsi %20, %23 : vector<16x16xi32>
    %25 = arith.cmpi eq, %22, %24 : vector<16x16xi32>
    %26 = arith.cmpi sle, %20, %19 : vector<16x16xi32>
    %27 = arith.andi %25, %26 : vector<16x16xi1>
    %cst = arith.constant 0.000000e+00 : f32
    %cst_11 = arith.constant -1.000000e+30 : f32
    %28 = vector.broadcast %cst : f32 to vector<16x16xf32>
    %29 = vector.broadcast %cst_11 : f32 to vector<16x16xf32>
    %30 = arith.select %27, %28, %29 : vector<16x16xi1>, vector<16x16xf32>
    %31 = tpu.iota {dimensions = array<i32: 0>} : vector<16x16xi32>
    %32 = tpu.iota {dimensions = array<i32: 1>} : vector<16x16xi32>
    %c3_i32_12 = arith.constant 3 : i32
    %33 = vector.broadcast %c3_i32_12 : i32 to vector<16x16xi32>
    %34 = arith.shrsi %31, %33 : vector<16x16xi32>
    %c3_i32_13 = arith.constant 3 : i32
    %35 = vector.broadcast %c3_i32_13 : i32 to vector<16x16xi32>
    %36 = arith.shrsi %32, %35 : vector<16x16xi32>
    %37 = arith.cmpi eq, %34, %36 : vector<16x16xi32>
    %cst_14 = arith.constant 0.000000e+00 : f32
    %cst_15 = arith.constant -1.000000e+30 : f32
    %38 = vector.broadcast %cst_14 : f32 to vector<16x16xf32>
    %39 = vector.broadcast %cst_15 : f32 to vector<16x16xf32>
    %40 = arith.select %37, %38, %39 : vector<16x16xi1>, vector<16x16xf32>
    %cst_16 = arith.constant dense<0.000000e+00> : vector<16xf32>
    %41 = vector.multi_reduction <add>, %0, %cst_16 [1] : vector<16x32xf32> to vector<16xf32>
    %42 = vector.shape_cast %41 : vector<16xf32> to vector<16x1xf32>
    %cst_17 = arith.constant 3.200000e+01 : f32
    %43 = vector.broadcast %cst_17 : f32 to vector<16x1xf32>
    %44 = arith.divf %42, %43 : vector<16x1xf32>
    %45 = vector.broadcast %44 : vector<16x1xf32> to vector<16x32xf32>
    %46 = arith.subf %0, %45 : vector<16x32xf32>
    %47 = arith.mulf %46, %46 : vector<16x32xf32>
    %cst_18 = arith.constant dense<0.000000e+00> : vector<16xf32>
    %48 = vector.multi_reduction <add>, %47, %cst_18 [1] : vector<16x32xf32> to vector<16xf32>
    %49 = vector.shape_cast %48 : vector<16xf32> to vector<16x1xf32>
    %cst_19 = arith.constant 3.200000e+01 : f32
    %50 = vector.broadcast %cst_19 : f32 to vector<16x1xf32>
    %51 = arith.divf %49, %50 : vector<16x1xf32>
    %cst_20 = arith.constant 9.99999974E-6 : f32
    %52 = vector.broadcast %cst_20 : f32 to vector<16x1xf32>
    %53 = arith.addf %51, %52 : vector<16x1xf32>
    %54 = math.rsqrt %53 : vector<16x1xf32>
    %55 = vector.broadcast %54 : vector<16x1xf32> to vector<16x32xf32>
    %56 = arith.mulf %46, %55 : vector<16x32xf32>
    %57 = vector.broadcast %13 : vector<1x32xf32> to vector<16x32xf32>
    %58 = arith.mulf %56, %57 : vector<16x32xf32>
    %59 = vector.broadcast %14 : vector<1x32xf32> to vector<16x32xf32>
    %60 = arith.addf %58, %59 : vector<16x32xf32>
    %cst_21 = arith.constant dense<0.000000e+00> : vector<16x128xf32>
    %61 = tpu.matmul %60, %2, %cst_21 {dimension_numbers = #tpu.dot_dimension_numbers<[1], [0], [0], [1], [0, 0, 1, 1], [], []>} : vector<16x32xf32>, vector<32x128xf32>, vector<16x128xf32> -> vector<16x128xf32>
    %62 = vector.broadcast %8 : vector<1x128xf32> to vector<16x128xf32>
    %63 = arith.addf %61, %62 : vector<16x128xf32>
    %cst_22 = arith.constant dense<0.000000e+00> : vector<16x128xf32>
    %64 = tpu.matmul %60, %3, %cst_22 {dimension_numbers = #tpu.dot_dimension_numbers<[1], [0], [0], [1], [0, 0, 1, 1], [], []>} : vector<16x32xf32>, vector<32x128xf32>, vector<16x128xf32> -> vector<16x128xf32>
    %65 = vector.extract_strided_slice %63 {offsets = [0, 0], sizes = [16, 32], strides = [1, 1]} : vector<16x128xf32> to vector<16x32xf32>
    %66 = vector.extract_strided_slice %63 {offsets = [0, 32], sizes = [16, 32], strides = [1, 1]} : vector<16x128xf32> to vector<16x32xf32>
    %67 = vector.extract_strided_slice %9 {offsets = [0, 0], sizes = [1, 32], strides = [1, 1]} : vector<1x128xf32> to vector<1x32xf32>
    %68 = vector.extract_strided_slice %65 {offsets = [0, 0], sizes = [16, 8], strides = [1, 1]} : vector<16x32xf32> to vector<16x8xf32>
    %69 = vector.extract_strided_slice %66 {offsets = [0, 0], sizes = [16, 8], strides = [1, 1]} : vector<16x32xf32> to vector<16x8xf32>
    %cst_23 = arith.constant dense<0.000000e+00> : vector<16x16xf32>
    %70 = tpu.matmul %68, %69, %cst_23 {dimension_numbers = #tpu.dot_dimension_numbers<[1], [1], [0], [0], [0, 0, 1, 0], [], []>} : vector<16x8xf32>, vector<16x8xf32>, vector<16x16xf32> -> vector<16x16xf32>
    %71 = arith.addf %70, %30 : vector<16x16xf32>
    %cst_24 = arith.constant dense<0xFF800000> : vector<16xf32>
    %72 = vector.multi_reduction <maximumf>, %71, %cst_24 [1] : vector<16x16xf32> to vector<16xf32>
    %73 = vector.shape_cast %72 : vector<16xf32> to vector<16x1xf32>
    %74 = vector.broadcast %73 : vector<16x1xf32> to vector<16x16xf32>
    %75 = arith.subf %71, %74 : vector<16x16xf32>
    %76 = math.exp %75 : vector<16x16xf32>
    %cst_25 = arith.constant dense<0.000000e+00> : vector<16xf32>
    %77 = vector.multi_reduction <add>, %76, %cst_25 [1] : vector<16x16xf32> to vector<16xf32>
    %78 = vector.shape_cast %77 : vector<16xf32> to vector<16x1xf32>
    %79 = tpu.reciprocal %78 {approx = true} : vector<16x1xf32> -> vector<16x1xf32>
    %80 = vector.broadcast %79 : vector<16x1xf32> to vector<16x16xf32>
    %81 = arith.mulf %76, %80 : vector<16x16xf32>
    %82 = vector.extract_strided_slice %64 {offsets = [0, 0], sizes = [16, 32], strides = [1, 1]} : vector<16x128xf32> to vector<16x32xf32>
    %cst_26 = arith.constant dense<0.000000e+00> : vector<16x32xf32>
    %83 = tpu.matmul %81, %82, %cst_26 {dimension_numbers = #tpu.dot_dimension_numbers<[1], [0], [0], [1], [0, 0, 1, 1], [], []>} : vector<16x16xf32>, vector<16x32xf32>, vector<16x32xf32> -> vector<16x32xf32>
    %84 = vector.broadcast %67 : vector<1x32xf32> to vector<16x32xf32>
    %85 = arith.addf %84, %83 : vector<16x32xf32>
    %86 = vector.extract_strided_slice %65 {offsets = [0, 8], sizes = [16, 8], strides = [1, 1]} : vector<16x32xf32> to vector<16x8xf32>
    %87 = vector.extract_strided_slice %66 {offsets = [0, 8], sizes = [16, 8], strides = [1, 1]} : vector<16x32xf32> to vector<16x8xf32>
    %cst_27 = arith.constant dense<0.000000e+00> : vector<16x16xf32>
    %88 = tpu.matmul %86, %87, %cst_27 {dimension_numbers = #tpu.dot_dimension_numbers<[1], [1], [0], [0], [0, 0, 1, 0], [], []>} : vector<16x8xf32>, vector<16x8xf32>, vector<16x16xf32> -> vector<16x16xf32>
    %89 = arith.addf %88, %30 : vector<16x16xf32>
    %cst_28 = arith.constant dense<0xFF800000> : vector<16xf32>
    %90 = vector.multi_reduction <maximumf>, %89, %cst_28 [1] : vector<16x16xf32> to vector<16xf32>
    %91 = vector.shape_cast %90 : vector<16xf32> to vector<16x1xf32>
    %92 = vector.broadcast %91 : vector<16x1xf32> to vector<16x16xf32>
    %93 = arith.subf %89, %92 : vector<16x16xf32>
    %94 = math.exp %93 : vector<16x16xf32>
    %cst_29 = arith.constant dense<0.000000e+00> : vector<16xf32>
    %95 = vector.multi_reduction <add>, %94, %cst_29 [1] : vector<16x16xf32> to vector<16xf32>
    %96 = vector.shape_cast %95 : vector<16xf32> to vector<16x1xf32>
    %97 = tpu.reciprocal %96 {approx = true} : vector<16x1xf32> -> vector<16x1xf32>
    %98 = vector.broadcast %97 : vector<16x1xf32> to vector<16x16xf32>
    %99 = arith.mulf %94, %98 : vector<16x16xf32>
    %100 = vector.extract_strided_slice %64 {offsets = [0, 32], sizes = [16, 32], strides = [1, 1]} : vector<16x128xf32> to vector<16x32xf32>
    %cst_30 = arith.constant dense<0.000000e+00> : vector<16x32xf32>
    %101 = tpu.matmul %99, %100, %cst_30 {dimension_numbers = #tpu.dot_dimension_numbers<[1], [0], [0], [1], [0, 0, 1, 1], [], []>} : vector<16x16xf32>, vector<16x32xf32>, vector<16x32xf32> -> vector<16x32xf32>
    %102 = arith.addf %85, %101 : vector<16x32xf32>
    %103 = vector.extract_strided_slice %65 {offsets = [0, 16], sizes = [16, 8], strides = [1, 1]} : vector<16x32xf32> to vector<16x8xf32>
    %104 = vector.extract_strided_slice %66 {offsets = [0, 16], sizes = [16, 8], strides = [1, 1]} : vector<16x32xf32> to vector<16x8xf32>
    %cst_31 = arith.constant dense<0.000000e+00> : vector<16x16xf32>
    %105 = tpu.matmul %103, %104, %cst_31 {dimension_numbers = #tpu.dot_dimension_numbers<[1], [1], [0], [0], [0, 0, 1, 0], [], []>} : vector<16x8xf32>, vector<16x8xf32>, vector<16x16xf32> -> vector<16x16xf32>
    %106 = arith.addf %105, %30 : vector<16x16xf32>
    %cst_32 = arith.constant dense<0xFF800000> : vector<16xf32>
    %107 = vector.multi_reduction <maximumf>, %106, %cst_32 [1] : vector<16x16xf32> to vector<16xf32>
    %108 = vector.shape_cast %107 : vector<16xf32> to vector<16x1xf32>
    %109 = vector.broadcast %108 : vector<16x1xf32> to vector<16x16xf32>
    %110 = arith.subf %106, %109 : vector<16x16xf32>
    %111 = math.exp %110 : vector<16x16xf32>
    %cst_33 = arith.constant dense<0.000000e+00> : vector<16xf32>
    %112 = vector.multi_reduction <add>, %111, %cst_33 [1] : vector<16x16xf32> to vector<16xf32>
    %113 = vector.shape_cast %112 : vector<16xf32> to vector<16x1xf32>
    %114 = tpu.reciprocal %113 {approx = true} : vector<16x1xf32> -> vector<16x1xf32>
    %115 = vector.broadcast %114 : vector<16x1xf32> to vector<16x16xf32>
    %116 = arith.mulf %111, %115 : vector<16x16xf32>
    %117 = vector.extract_strided_slice %64 {offsets = [0, 64], sizes = [16, 32], strides = [1, 1]} : vector<16x128xf32> to vector<16x32xf32>
    %cst_34 = arith.constant dense<0.000000e+00> : vector<16x32xf32>
    %118 = tpu.matmul %116, %117, %cst_34 {dimension_numbers = #tpu.dot_dimension_numbers<[1], [0], [0], [1], [0, 0, 1, 1], [], []>} : vector<16x16xf32>, vector<16x32xf32>, vector<16x32xf32> -> vector<16x32xf32>
    %119 = arith.addf %102, %118 : vector<16x32xf32>
    %120 = vector.extract_strided_slice %65 {offsets = [0, 24], sizes = [16, 8], strides = [1, 1]} : vector<16x32xf32> to vector<16x8xf32>
    %121 = vector.extract_strided_slice %66 {offsets = [0, 24], sizes = [16, 8], strides = [1, 1]} : vector<16x32xf32> to vector<16x8xf32>
    %cst_35 = arith.constant dense<0.000000e+00> : vector<16x16xf32>
    %122 = tpu.matmul %120, %121, %cst_35 {dimension_numbers = #tpu.dot_dimension_numbers<[1], [1], [0], [0], [0, 0, 1, 0], [], []>} : vector<16x8xf32>, vector<16x8xf32>, vector<16x16xf32> -> vector<16x16xf32>
    %123 = arith.addf %122, %30 : vector<16x16xf32>
    %cst_36 = arith.constant dense<0xFF800000> : vector<16xf32>
    %124 = vector.multi_reduction <maximumf>, %123, %cst_36 [1] : vector<16x16xf32> to vector<16xf32>
    %125 = vector.shape_cast %124 : vector<16xf32> to vector<16x1xf32>
    %126 = vector.broadcast %125 : vector<16x1xf32> to vector<16x16xf32>
    %127 = arith.subf %123, %126 : vector<16x16xf32>
    %128 = math.exp %127 : vector<16x16xf32>
    %cst_37 = arith.constant dense<0.000000e+00> : vector<16xf32>
    %129 = vector.multi_reduction <add>, %128, %cst_37 [1] : vector<16x16xf32> to vector<16xf32>
    %130 = vector.shape_cast %129 : vector<16xf32> to vector<16x1xf32>
    %131 = tpu.reciprocal %130 {approx = true} : vector<16x1xf32> -> vector<16x1xf32>
    %132 = vector.broadcast %131 : vector<16x1xf32> to vector<16x16xf32>
    %133 = arith.mulf %128, %132 : vector<16x16xf32>
    %134 = vector.extract_strided_slice %64 {offsets = [0, 96], sizes = [16, 32], strides = [1, 1]} : vector<16x128xf32> to vector<16x32xf32>
    %cst_38 = arith.constant dense<0.000000e+00> : vector<16x32xf32>
    %135 = tpu.matmul %133, %134, %cst_38 {dimension_numbers = #tpu.dot_dimension_numbers<[1], [0], [0], [1], [0, 0, 1, 1], [], []>} : vector<16x16xf32>, vector<16x32xf32>, vector<16x32xf32> -> vector<16x32xf32>
    %136 = arith.addf %119, %135 : vector<16x32xf32>
    %137 = arith.addf %0, %136 : vector<16x32xf32>
    %cst_39 = arith.constant dense<0.000000e+00> : vector<16xf32>
    %138 = vector.multi_reduction <add>, %137, %cst_39 [1] : vector<16x32xf32> to vector<16xf32>
    %139 = vector.shape_cast %138 : vector<16xf32> to vector<16x1xf32>
    %cst_40 = arith.constant 3.200000e+01 : f32
    %140 = vector.broadcast %cst_40 : f32 to vector<16x1xf32>
    %141 = arith.divf %139, %140 : vector<16x1xf32>
    %142 = vector.broadcast %141 : vector<16x1xf32> to vector<16x32xf32>
    %143 = arith.subf %137, %142 : vector<16x32xf32>
    %144 = arith.mulf %143, %143 : vector<16x32xf32>
    %cst_41 = arith.constant dense<0.000000e+00> : vector<16xf32>
    %145 = vector.multi_reduction <add>, %144, %cst_41 [1] : vector<16x32xf32> to vector<16xf32>
    %146 = vector.shape_cast %145 : vector<16xf32> to vector<16x1xf32>
    %cst_42 = arith.constant 3.200000e+01 : f32
    %147 = vector.broadcast %cst_42 : f32 to vector<16x1xf32>
    %148 = arith.divf %146, %147 : vector<16x1xf32>
    %cst_43 = arith.constant 9.99999974E-6 : f32
    %149 = vector.broadcast %cst_43 : f32 to vector<16x1xf32>
    %150 = arith.addf %148, %149 : vector<16x1xf32>
    %151 = math.rsqrt %150 : vector<16x1xf32>
    %152 = vector.broadcast %151 : vector<16x1xf32> to vector<16x32xf32>
    %153 = arith.mulf %143, %152 : vector<16x32xf32>
    %154 = vector.broadcast %15 : vector<1x32xf32> to vector<16x32xf32>
    %155 = arith.mulf %153, %154 : vector<16x32xf32>
    %156 = vector.broadcast %16 : vector<1x32xf32> to vector<16x32xf32>
    %157 = arith.addf %155, %156 : vector<16x32xf32>
    %158 = vector.extract_strided_slice %2 {offsets = [0, 64], sizes = [32, 32], strides = [1, 1]} : vector<32x128xf32> to vector<32x32xf32>
    %cst_44 = arith.constant dense<0.000000e+00> : vector<16x32xf32>
    %159 = tpu.matmul %157, %158, %cst_44 {dimension_numbers = #tpu.dot_dimension_numbers<[1], [0], [0], [1], [0, 0, 1, 1], [], []>} : vector<16x32xf32>, vector<32x32xf32>, vector<16x32xf32> -> vector<16x32xf32>
    %160 = vector.extract_strided_slice %8 {offsets = [0, 64], sizes = [1, 32], strides = [1, 1]} : vector<1x128xf32> to vector<1x32xf32>
    %161 = vector.broadcast %160 : vector<1x32xf32> to vector<16x32xf32>
    %162 = arith.addf %159, %161 : vector<16x32xf32>
    %163 = vector.extract_strided_slice %2 {offsets = [0, 96], sizes = [32, 32], strides = [1, 1]} : vector<32x128xf32> to vector<32x32xf32>
    %cst_45 = arith.constant dense<0.000000e+00> : vector<16x32xf32>
    %164 = tpu.matmul %1, %163, %cst_45 {dimension_numbers = #tpu.dot_dimension_numbers<[1], [0], [0], [1], [0, 0, 1, 1], [], []>} : vector<16x32xf32>, vector<32x32xf32>, vector<16x32xf32> -> vector<16x32xf32>
    %165 = vector.extract_strided_slice %8 {offsets = [0, 96], sizes = [1, 32], strides = [1, 1]} : vector<1x128xf32> to vector<1x32xf32>
    %166 = vector.broadcast %165 : vector<1x32xf32> to vector<16x32xf32>
    %167 = arith.addf %164, %166 : vector<16x32xf32>
    %cst_46 = arith.constant dense<0.000000e+00> : vector<16x128xf32>
    %168 = tpu.matmul %1, %4, %cst_46 {dimension_numbers = #tpu.dot_dimension_numbers<[1], [0], [0], [1], [0, 0, 1, 1], [], []>} : vector<16x32xf32>, vector<32x128xf32>, vector<16x128xf32> -> vector<16x128xf32>
    %169 = vector.extract_strided_slice %9 {offsets = [0, 32], sizes = [1, 32], strides = [1, 1]} : vector<1x128xf32> to vector<1x32xf32>
    %170 = vector.extract_strided_slice %162 {offsets = [0, 0], sizes = [16, 8], strides = [1, 1]} : vector<16x32xf32> to vector<16x8xf32>
    %171 = vector.extract_strided_slice %167 {offsets = [0, 0], sizes = [16, 8], strides = [1, 1]} : vector<16x32xf32> to vector<16x8xf32>
    %cst_47 = arith.constant dense<0.000000e+00> : vector<16x16xf32>
    %172 = tpu.matmul %170, %171, %cst_47 {dimension_numbers = #tpu.dot_dimension_numbers<[1], [1], [0], [0], [0, 0, 1, 0], [], []>} : vector<16x8xf32>, vector<16x8xf32>, vector<16x16xf32> -> vector<16x16xf32>
    %173 = arith.addf %172, %40 : vector<16x16xf32>
    %cst_48 = arith.constant dense<0xFF800000> : vector<16xf32>
    %174 = vector.multi_reduction <maximumf>, %173, %cst_48 [1] : vector<16x16xf32> to vector<16xf32>
    %175 = vector.shape_cast %174 : vector<16xf32> to vector<16x1xf32>
    %176 = vector.broadcast %175 : vector<16x1xf32> to vector<16x16xf32>
    %177 = arith.subf %173, %176 : vector<16x16xf32>
    %178 = math.exp %177 : vector<16x16xf32>
    %cst_49 = arith.constant dense<0.000000e+00> : vector<16xf32>
    %179 = vector.multi_reduction <add>, %178, %cst_49 [1] : vector<16x16xf32> to vector<16xf32>
    %180 = vector.shape_cast %179 : vector<16xf32> to vector<16x1xf32>
    %181 = tpu.reciprocal %180 {approx = true} : vector<16x1xf32> -> vector<16x1xf32>
    %182 = vector.broadcast %181 : vector<16x1xf32> to vector<16x16xf32>
    %183 = arith.mulf %178, %182 : vector<16x16xf32>
    %184 = vector.extract_strided_slice %168 {offsets = [0, 0], sizes = [16, 32], strides = [1, 1]} : vector<16x128xf32> to vector<16x32xf32>
    %cst_50 = arith.constant dense<0.000000e+00> : vector<16x32xf32>
    %185 = tpu.matmul %183, %184, %cst_50 {dimension_numbers = #tpu.dot_dimension_numbers<[1], [0], [0], [1], [0, 0, 1, 1], [], []>} : vector<16x16xf32>, vector<16x32xf32>, vector<16x32xf32> -> vector<16x32xf32>
    %186 = vector.broadcast %169 : vector<1x32xf32> to vector<16x32xf32>
    %187 = arith.addf %186, %185 : vector<16x32xf32>
    %188 = vector.extract_strided_slice %162 {offsets = [0, 8], sizes = [16, 8], strides = [1, 1]} : vector<16x32xf32> to vector<16x8xf32>
    %189 = vector.extract_strided_slice %167 {offsets = [0, 8], sizes = [16, 8], strides = [1, 1]} : vector<16x32xf32> to vector<16x8xf32>
    %cst_51 = arith.constant dense<0.000000e+00> : vector<16x16xf32>
    %190 = tpu.matmul %188, %189, %cst_51 {dimension_numbers = #tpu.dot_dimension_numbers<[1], [1], [0], [0], [0, 0, 1, 0], [], []>} : vector<16x8xf32>, vector<16x8xf32>, vector<16x16xf32> -> vector<16x16xf32>
    %191 = arith.addf %190, %40 : vector<16x16xf32>
    %cst_52 = arith.constant dense<0xFF800000> : vector<16xf32>
    %192 = vector.multi_reduction <maximumf>, %191, %cst_52 [1] : vector<16x16xf32> to vector<16xf32>
    %193 = vector.shape_cast %192 : vector<16xf32> to vector<16x1xf32>
    %194 = vector.broadcast %193 : vector<16x1xf32> to vector<16x16xf32>
    %195 = arith.subf %191, %194 : vector<16x16xf32>
    %196 = math.exp %195 : vector<16x16xf32>
    %cst_53 = arith.constant dense<0.000000e+00> : vector<16xf32>
    %197 = vector.multi_reduction <add>, %196, %cst_53 [1] : vector<16x16xf32> to vector<16xf32>
    %198 = vector.shape_cast %197 : vector<16xf32> to vector<16x1xf32>
    %199 = tpu.reciprocal %198 {approx = true} : vector<16x1xf32> -> vector<16x1xf32>
    %200 = vector.broadcast %199 : vector<16x1xf32> to vector<16x16xf32>
    %201 = arith.mulf %196, %200 : vector<16x16xf32>
    %202 = vector.extract_strided_slice %168 {offsets = [0, 32], sizes = [16, 32], strides = [1, 1]} : vector<16x128xf32> to vector<16x32xf32>
    %cst_54 = arith.constant dense<0.000000e+00> : vector<16x32xf32>
    %203 = tpu.matmul %201, %202, %cst_54 {dimension_numbers = #tpu.dot_dimension_numbers<[1], [0], [0], [1], [0, 0, 1, 1], [], []>} : vector<16x16xf32>, vector<16x32xf32>, vector<16x32xf32> -> vector<16x32xf32>
    %204 = arith.addf %187, %203 : vector<16x32xf32>
    %205 = vector.extract_strided_slice %162 {offsets = [0, 16], sizes = [16, 8], strides = [1, 1]} : vector<16x32xf32> to vector<16x8xf32>
    %206 = vector.extract_strided_slice %167 {offsets = [0, 16], sizes = [16, 8], strides = [1, 1]} : vector<16x32xf32> to vector<16x8xf32>
    %cst_55 = arith.constant dense<0.000000e+00> : vector<16x16xf32>
    %207 = tpu.matmul %205, %206, %cst_55 {dimension_numbers = #tpu.dot_dimension_numbers<[1], [1], [0], [0], [0, 0, 1, 0], [], []>} : vector<16x8xf32>, vector<16x8xf32>, vector<16x16xf32> -> vector<16x16xf32>
    %208 = arith.addf %207, %40 : vector<16x16xf32>
    %cst_56 = arith.constant dense<0xFF800000> : vector<16xf32>
    %209 = vector.multi_reduction <maximumf>, %208, %cst_56 [1] : vector<16x16xf32> to vector<16xf32>
    %210 = vector.shape_cast %209 : vector<16xf32> to vector<16x1xf32>
    %211 = vector.broadcast %210 : vector<16x1xf32> to vector<16x16xf32>
    %212 = arith.subf %208, %211 : vector<16x16xf32>
    %213 = math.exp %212 : vector<16x16xf32>
    %cst_57 = arith.constant dense<0.000000e+00> : vector<16xf32>
    %214 = vector.multi_reduction <add>, %213, %cst_57 [1] : vector<16x16xf32> to vector<16xf32>
    %215 = vector.shape_cast %214 : vector<16xf32> to vector<16x1xf32>
    %216 = tpu.reciprocal %215 {approx = true} : vector<16x1xf32> -> vector<16x1xf32>
    %217 = vector.broadcast %216 : vector<16x1xf32> to vector<16x16xf32>
    %218 = arith.mulf %213, %217 : vector<16x16xf32>
    %219 = vector.extract_strided_slice %168 {offsets = [0, 64], sizes = [16, 32], strides = [1, 1]} : vector<16x128xf32> to vector<16x32xf32>
    %cst_58 = arith.constant dense<0.000000e+00> : vector<16x32xf32>
    %220 = tpu.matmul %218, %219, %cst_58 {dimension_numbers = #tpu.dot_dimension_numbers<[1], [0], [0], [1], [0, 0, 1, 1], [], []>} : vector<16x16xf32>, vector<16x32xf32>, vector<16x32xf32> -> vector<16x32xf32>
    %221 = arith.addf %204, %220 : vector<16x32xf32>
    %222 = vector.extract_strided_slice %162 {offsets = [0, 24], sizes = [16, 8], strides = [1, 1]} : vector<16x32xf32> to vector<16x8xf32>
    %223 = vector.extract_strided_slice %167 {offsets = [0, 24], sizes = [16, 8], strides = [1, 1]} : vector<16x32xf32> to vector<16x8xf32>
    %cst_59 = arith.constant dense<0.000000e+00> : vector<16x16xf32>
    %224 = tpu.matmul %222, %223, %cst_59 {dimension_numbers = #tpu.dot_dimension_numbers<[1], [1], [0], [0], [0, 0, 1, 0], [], []>} : vector<16x8xf32>, vector<16x8xf32>, vector<16x16xf32> -> vector<16x16xf32>
    %225 = arith.addf %224, %40 : vector<16x16xf32>
    %cst_60 = arith.constant dense<0xFF800000> : vector<16xf32>
    %226 = vector.multi_reduction <maximumf>, %225, %cst_60 [1] : vector<16x16xf32> to vector<16xf32>
    %227 = vector.shape_cast %226 : vector<16xf32> to vector<16x1xf32>
    %228 = vector.broadcast %227 : vector<16x1xf32> to vector<16x16xf32>
    %229 = arith.subf %225, %228 : vector<16x16xf32>
    %230 = math.exp %229 : vector<16x16xf32>
    %cst_61 = arith.constant dense<0.000000e+00> : vector<16xf32>
    %231 = vector.multi_reduction <add>, %230, %cst_61 [1] : vector<16x16xf32> to vector<16xf32>
    %232 = vector.shape_cast %231 : vector<16xf32> to vector<16x1xf32>
    %233 = tpu.reciprocal %232 {approx = true} : vector<16x1xf32> -> vector<16x1xf32>
    %234 = vector.broadcast %233 : vector<16x1xf32> to vector<16x16xf32>
    %235 = arith.mulf %230, %234 : vector<16x16xf32>
    %236 = vector.extract_strided_slice %168 {offsets = [0, 96], sizes = [16, 32], strides = [1, 1]} : vector<16x128xf32> to vector<16x32xf32>
    %cst_62 = arith.constant dense<0.000000e+00> : vector<16x32xf32>
    %237 = tpu.matmul %235, %236, %cst_62 {dimension_numbers = #tpu.dot_dimension_numbers<[1], [0], [0], [1], [0, 0, 1, 1], [], []>} : vector<16x16xf32>, vector<16x32xf32>, vector<16x32xf32> -> vector<16x32xf32>
    %238 = arith.addf %221, %237 : vector<16x32xf32>
    %239 = arith.addf %137, %238 : vector<16x32xf32>
    %cst_63 = arith.constant dense<0.000000e+00> : vector<16xf32>
    %240 = vector.multi_reduction <add>, %239, %cst_63 [1] : vector<16x32xf32> to vector<16xf32>
    %241 = vector.shape_cast %240 : vector<16xf32> to vector<16x1xf32>
    %cst_64 = arith.constant 3.200000e+01 : f32
    %242 = vector.broadcast %cst_64 : f32 to vector<16x1xf32>
    %243 = arith.divf %241, %242 : vector<16x1xf32>
    %244 = vector.broadcast %243 : vector<16x1xf32> to vector<16x32xf32>
    %245 = arith.subf %239, %244 : vector<16x32xf32>
    %246 = arith.mulf %245, %245 : vector<16x32xf32>
    %cst_65 = arith.constant dense<0.000000e+00> : vector<16xf32>
    %247 = vector.multi_reduction <add>, %246, %cst_65 [1] : vector<16x32xf32> to vector<16xf32>
    %248 = vector.shape_cast %247 : vector<16xf32> to vector<16x1xf32>
    %cst_66 = arith.constant 3.200000e+01 : f32
    %249 = vector.broadcast %cst_66 : f32 to vector<16x1xf32>
    %250 = arith.divf %248, %249 : vector<16x1xf32>
    %cst_67 = arith.constant 9.99999974E-6 : f32
    %251 = vector.broadcast %cst_67 : f32 to vector<16x1xf32>
    %252 = arith.addf %250, %251 : vector<16x1xf32>
    %253 = math.rsqrt %252 : vector<16x1xf32>
    %254 = vector.broadcast %253 : vector<16x1xf32> to vector<16x32xf32>
    %255 = arith.mulf %245, %254 : vector<16x32xf32>
    %256 = vector.broadcast %17 : vector<1x32xf32> to vector<16x32xf32>
    %257 = arith.mulf %255, %256 : vector<16x32xf32>
    %258 = vector.broadcast %18 : vector<1x32xf32> to vector<16x32xf32>
    %259 = arith.addf %257, %258 : vector<16x32xf32>
    %cst_68 = arith.constant dense<0.000000e+00> : vector<16x128xf32>
    %260 = tpu.matmul %259, %5, %cst_68 {dimension_numbers = #tpu.dot_dimension_numbers<[1], [0], [0], [1], [0, 0, 1, 1], [], []>} : vector<16x32xf32>, vector<32x128xf32>, vector<16x128xf32> -> vector<16x128xf32>
    %261 = vector.broadcast %10 : vector<1x128xf32> to vector<16x128xf32>
    %262 = arith.addf %260, %261 : vector<16x128xf32>
    %cst_69 = arith.constant 0.000000e+00 : f32
    %263 = vector.broadcast %cst_69 : f32 to vector<16x128xf32>
    %264 = arith.maximumf %262, %263 : vector<16x128xf32>
    %cst_70 = arith.constant dense<0.000000e+00> : vector<16x32xf32>
    %265 = tpu.matmul %264, %6, %cst_70 {dimension_numbers = #tpu.dot_dimension_numbers<[1], [1], [0], [0], [0, 0, 1, 0], [], []>} : vector<16x128xf32>, vector<32x128xf32>, vector<16x32xf32> -> vector<16x32xf32>
    %266 = vector.extract_strided_slice %9 {offsets = [0, 64], sizes = [1, 32], strides = [1, 1]} : vector<1x128xf32> to vector<1x32xf32>
    %267 = vector.broadcast %266 : vector<1x32xf32> to vector<16x32xf32>
    %268 = arith.addf %265, %267 : vector<16x32xf32>
    %269 = arith.addf %239, %268 : vector<16x32xf32>
    %c0_71 = arith.constant 0 : index
    %c0_72 = arith.constant 0 : index
    %270 = vector.load %arg3[%c0_71, %c0_72] : memref<16x32xf32, #tpu.memory_space<vmem>>, vector<16x32xf32>
    tpu.vector_store %arg3[%c0_71, %c0_72], %269 {strides = array<i32>} : memref<16x32xf32, #tpu.memory_space<vmem>>, vector<16x32xf32>,
    return
  }
}

</mosaic_0001>

<llo_original>
// kernel: decoder_forward.1
$region0: #{decoder_forward.1}
  #allocation0 [shape = 'u32[]', space=smem, size = 0x4, offset = 0x4, fixed_abs, tag = 'smem constant byte address 0x4 - core index']
  #allocation1 [shape = 'u32[144,128]{1,0:T(1,128)}', space=vmem, size = 0x12000, scoped, tag = 'internal scratch']
  %s0 = inlined_call_operand.vmem [shape: f32[16,32], index: 0, kind: input, shape index: {}]
  %s1 = inlined_call_operand.vmem [shape: f32[16,32], index: 1, kind: input, shape index: {}]
  %s2 = inlined_call_operand.vmem [shape: f32[168,128], index: 2, kind: input, shape index: {}]
  %s3 = inlined_call_operand.hbm [shape: f32[16,32], index: 3, kind: output, shape index: {}]
  %s4 = sld [smem:[#allocation0]]
  $region22: #{decoder_forward.1} parent=0
    _
  %s6 = ssub.s32 1, %s4
  %s7 = scalar_select 0, %s6, %s4
  $region1: #{decoder_forward.1} parent=0
    #allocation2 [shape = 'u8[8192]{0}', space=vmem, size = 0x2000, scoped, tag = 'output window, operand 0, single buffered']
    #allocation3 [shape = 's32[1]{0}', space=sflag, size = 0x4, scoped, tag = 'scoped memory for decoder_forward.1']
    %8 = vsyncpa [#allocation3], 0
    // Predicated region
    $region2: #{decoder_forward.1} parent=1 // pred_check
      _
    $region3: #{decoder_forward.1} parent=1 // pred_check_branch
      %10 = sbr.rel (0) target = $region5
    $region4: #{decoder_forward.1} parent=1 // pred_region
      _
    $region5: #{decoder_forward.1} parent=1 // pred_fallthru
      _
    // Predicated region
    $region6: #{decoder_forward.1} parent=1 // pred_check
      _
    $region7: #{decoder_forward.1} parent=1 // pred_check_branch
      %12 = sbr.rel (0) target = $region9
    $region8: #{decoder_forward.1} parent=1 // pred_region
      _
    $region9: #{decoder_forward.1} parent=1 // pred_fallthru
      _
    // Predicated region
    $region10: #{decoder_forward.1} parent=1 // pred_check
      _
    $region11: #{decoder_forward.1} parent=1 // pred_check_branch
      %14 = sbr.rel (0) target = $region13
    $region12: #{decoder_forward.1} parent=1 // pred_region
      _
    $region13: #{decoder_forward.1} parent=1 // pred_fallthru
      _
    %v15 = vld [vmem:[%s1] sm:$0xff]
    %v16 = vld [vmem:[%s1 + $0x8] sm:$0xff]
    %v17 = vld [vmem:[%s0] sm:$0xff]
    %v18 = vld [vmem:[%s0 + $0x8] sm:$0xff]
    %v19 = vld [vmem:[%s2] sm:$0xff]
    %v20 = vld [vmem:[%s2 + $0x8] sm:$0xff]
    %v21 = vld [vmem:[%s2 + $0x10] sm:$0xff]
    %v22 = vld [vmem:[%s2 + $0x18] sm:$0xff]
    %v23 = vld [vmem:[%s2 + $0x20] sm:$0xff]
    %v24 = vld [vmem:[%s2 + $0x28] sm:$0xff]
    %v25 = vld [vmem:[%s2 + $0x30] sm:$0xff]
    %v26 = vld [vmem:[%s2 + $0x38] sm:$0xff]
    %v27 = vld [vmem:[%s2 + $0x40] sm:$0xff]
    %v28 = vld [vmem:[%s2 + $0x48] sm:$0xff]
    %v29 = vld [vmem:[%s2 + $0x50] sm:$0xff]
    %v30 = vld [vmem:[%s2 + $0x58] sm:$0xff]
    %v31 = vld [vmem:[%s2 + $0x60] sm:$0xff]
    %v32 = vld [vmem:[%s2 + $0x68] sm:$0xff]
    %v33 = vld [vmem:[%s2 + $0x70] sm:$0xff]
    %v34 = vld [vmem:[%s2 + $0x78] sm:$0xff]
    %v35 = vld [vmem:[%s2 + $0x80] sm:$0xff]
    %v36 = vld [vmem:[%s2 + $0x88] sm:$0xff]
    %v37 = vld [vmem:[%s2 + $0x90] sm:$0xff]
    %v38 = vld [vmem:[%s2 + $0x98] sm:$0xff]
    %v39 = vld [vmem:[%s2 + $0xa0] sm:$0xff]
    %v40 = vlaneseq
    %v41 = vshrl.u32 %v40, 7
    %v42 = vadd.s32 %v41, 8
    %v43 = vlaneseq
    %v44 = vand.u32 %v43, 127
    %v45 = vshra.s32 %v41, 3
    %v46 = vshra.s32 %v42, 3
    %v47 = vshra.s32 %v44, 3
    %vm48 = vcmp.eq.s32.totalorder %v45, %v47
    %vm49 = vcmp.eq.s32.totalorder %v46, %v47
    %vm50 = vcmp.le.s32.totalorder %v44, %v41
    %vm51 = vcmp.le.s32.totalorder %v44, %v42
    %vm52 = vmand %vm48, %vm50
    %vm53 = vmand %vm49, %vm51
    %v54 = vsel %vm52, 0.0, -1e+30
    %v55 = vsel %vm53, 0.0, -1e+30
    %v56 = vsel %vm48, 0.0, -1e+30
    %v57 = vsel %vm49, 0.0, -1e+30
    %vm58 = vcmask 261120
    %v59 = vsel %vm58, %v15, 0.0
    %60 = vadd.xlane.f32.xlu0 %v59
    %v61 = vpop.xlane.xlu0 %60
    %v62 = vsel %vm58, %v16, 0.0
    %63 = vadd.xlane.f32.xlu0 %v62
    %v64 = vpop.xlane.xlu0 %63
    %v65 = vrcp.pop 32.0
    %v66 = vmul.f32 %v61, %v65
    %v67 = vmul.f32 %v64, %v65
    %v68 = vsub.f32 %v15, %v66
    %v69 = vsub.f32 %v16, %v67
    %v70 = vmul.f32 %v68, %v68
    %v71 = vmul.f32 %v69, %v69
    %v72 = vsel %vm58, %v70, 0.0
    %73 = vadd.xlane.f32.xlu0 %v72
    %v74 = vpop.xlane.xlu0 %73
    %v75 = vsel %vm58, %v71, 0.0
    %76 = vadd.xlane.f32.xlu0 %v75
    %v77 = vpop.xlane.xlu0 %76
    %v78 = vmul.f32 %v74, %v65
    %v79 = vmul.f32 %v77, %v65
    %v80 = vadd.f32 %v78, 1e-05
    %v81 = vadd.f32 %v79, 1e-05
    %v82 = vrsqrt.pop %v80
    %v83 = vrsqrt.pop %v81
    %v84 = vmul.f32 %v68, %v82
    %v85 = vmul.f32 %v69, %v83
    %v86 = vlaneseq
    %v87 = vshrl.u32 %v86, 7
    %v88 = vsub.s32 3, %v87
    %v89 = vrot.slane %v39, %v88
    %v90 = vmul.f32 %v84, %v89
    %v91 = vmul.f32 %v85, %v89
    %93 = vrot.lane.b32.xlu0 %v89, 96
    %v94 = vpop.permute.xlu0 %93
    %v96 = vadd.f32 %v90, %v94
    %v97 = vadd.f32 %v91, %v94
    %v98 = vlaneseq
    %v99 = vshrl.u32 %v98, 7
    %v100 = vsub.s32 0, %v99
    %v101 = vrot.slane %v39, %v100
    %v103 = vsel %vm58, %v96, 0
    %v106 = vsel %vm58, %v97, 0
    %108 = vmatprep.subr.mxu0 0.0
    %109 = vmatpush1.msra.mxu0 %v19
    %110 = vmatprep.subr.mxu0 0.0
    %111 = vmatpush1.msra.mxu0 %v20
    %112 = vmatprep.subr.mxu0 0.0
    %113 = vmatpush1.msra.mxu0 %v21
    %114 = vmatprep.subr.mxu0 0.0
    %115 = vmatpush1.msra.mxu0 %v22
    %116 = vmatprep.subr.mxu0 0.0
    %117 = vmatpush1.msra.mxu0 0.0
    %118 = vmatprep.subr.mxu0 0.0
    %119 = vmatpush1.msra.mxu0 0.0
    %120 = vmatprep.subr.mxu0 0.0
    %121 = vmatpush1.msra.mxu0 0.0
    %122 = vmatprep.subr.mxu0 0.0
    %123 = vmatpush1.msra.mxu0 0.0
    %124 = vmatprep.subr.mxu0 0.0
    %125 = vmatpush1.msra.mxu0 0.0
    %126 = vmatprep.subr.mxu0 0.0
    %127 = vmatpush1.msra.mxu0 0.0
    %128 = vmatprep.subr.mxu0 0.0
    %129 = vmatpush1.msra.mxu0 0.0
    %130 = vmatprep.subr.mxu0 0.0
    %131 = vmatpush1.msra.mxu0 0.0
    %132 = vmatprep.subr.mxu0 0.0
    %133 = vmatpush1.msra.mxu0 0.0
    %134 = vmatprep.subr.mxu0 0.0
    %135 = vmatpush1.msra.mxu0 0.0
    %136 = vmatprep.subr.mxu0 0.0
    %137 = vmatpush1.msra.mxu0 0.0
    %138 = vmatprep.subr.mxu0 0.0
    %139 = vmatpush1.msra.mxu0 0.0
    %140 = vmatprep.subr.mxu0 0.0
    %141 = vmatpush1.msra.mxu0 0.0
    %142 = vmatprep.subr.mxu0 0.0
    %143 = vmatpush1.msra.mxu0 0.0
    %144 = vmatprep.subr.mxu0 0.0
    %145 = vmatpush1.msra.mxu0 0.0
    %146 = vmatprep.subr.mxu0 0.0
    %147 = vmatpush1.msra.mxu0 0.0
    %148 = vmatprep.subr.mxu0 0.0
    %149 = vmatpush1.msra.mxu0 0.0
    %150 = vmatprep.subr.mxu0 0.0
    %151 = vmatpush1.msra.mxu0 0.0
    %152 = vmatprep.subr.mxu0 0.0
    %153 = vmatpush1.msra.mxu0 0.0
    %154 = vmatprep.subr.mxu0 0.0
    %155 = vmatpush1.msra.mxu0 0.0
    %156 = vmatprep.subr.mxu0 0.0
    %157 = vmatpush1.msra.mxu0 0.0
    %158 = vmatprep.subr.mxu0 0.0
    %159 = vmatpush1.msra.mxu0 0.0
    %160 = vmatprep.subr.mxu0 0.0
    %161 = vmatpush1.msra.mxu0 0.0
    %162 = vmatprep.subr.mxu0 0.0
    %163 = vmatpush1.msra.mxu0 0.0
    %164 = vmatprep.subr.mxu0 0.0
    %165 = vmatpush1.msra.mxu0 0.0
    %166 = vmatprep.subr.mxu0 0.0
    %167 = vmatpush1.msra.mxu0 0.0
    %168 = vmatprep.subr.mxu0 0.0
    %169 = vmatpush1.msra.mxu0 0.0
    %170 = vmatprep.subr.mxu0 0.0
    %171 = vmatpush1.msra.mxu0 0.0
    %172 = vmatprep.mubr.f32.mxu0 0.0
    %173 = vmatmul.mubr.f32.gmra.mrb[0].mxu0 %v103
    %v174 = vpop.f32.mrb[0].mxu0
    %v175 = vadd.f32 %v101, %v174
    %v176 = vpop.f32.mrb[0].mxu0
    %177 = vmatprep.mubr.f32.mxu0 0.0
    %178 = vmatmul.mubr.f32.gmra.mrb[0].mxu0 %v106
    %v179 = vpop.f32.mrb[0].mxu0
    %v180 = vadd.f32 %v101, %v179
    %v181 = vpop.f32.mrb[0].mxu0
    %182 = vdwg.mxu0
    %183 = vmatprep.subr.mxu0 0.0
    %184 = vmatpush1.msra.mxu0 %v23
    %185 = vmatprep.subr.mxu0 0.0
    %186 = vmatpush1.msra.mxu0 %v24
    %187 = vmatprep.subr.mxu0 0.0
    %188 = vmatpush1.msra.mxu0 %v25
    %189 = vmatprep.subr.mxu0 0.0
    %190 = vmatpush1.msra.mxu0 %v26
    %191 = vmatprep.subr.mxu0 0.0
    %192 = vmatpush1.msra.mxu0 0.0
    %193 = vmatprep.subr.mxu0 0.0
    %194 = vmatpush1.msra.mxu0 0.0
    %195 = vmatprep.subr.mxu0 0.0
    %196 = vmatpush1.msra.mxu0 0.0
    %197 = vmatprep.subr.mxu0 0.0
    %198 = vmatpush1.msra.mxu0 0.0
    %199 = vmatprep.subr.mxu0 0.0
    %200 = vmatpush1.msra.mxu0 0.0
    %201 = vmatprep.subr.mxu0 0.0
    %202 = vmatpush1.msra.mxu0 0.0
    %203 = vmatprep.subr.mxu0 0.0
    %204 = vmatpush1.msra.mxu0 0.0
    %205 = vmatprep.subr.mxu0 0.0
    %206 = vmatpush1.msra.mxu0 0.0
    %207 = vmatprep.subr.mxu0 0.0
    %208 = vmatpush1.msra.mxu0 0.0
    %209 = vmatprep.subr.mxu0 0.0
    %210 = vmatpush1.msra.mxu0 0.0
    %211 = vmatprep.subr.mxu0 0.0
    %212 = vmatpush1.msra.mxu0 0.0
    %213 = vmatprep.subr.mxu0 0.0
    %214 = vmatpush1.msra.mxu0 0.0
    %215 = vmatprep.subr.mxu0 0.0
    %216 = vmatpush1.msra.mxu0 0.0
    %217 = vmatprep.subr.mxu0 0.0
    %218 = vmatpush1.msra.mxu0 0.0
    %219 = vmatprep.subr.mxu0 0.0
    %220 = vmatpush1.msra.mxu0 0.0
    %221 = vmatprep.subr.mxu0 0.0
    %222 = vmatpush1.msra.mxu0 0.0
    %223 = vmatprep.subr.mxu0 0.0
    %224 = vmatpush1.msra.mxu0 0.0
    %225 = vmatprep.subr.mxu0 0.0
    %226 = vmatpush1.msra.mxu0 0.0
    %227 = vmatprep.subr.mxu0 0.0
    %228 = vmatpush1.msra.mxu0 0.0
    %229 = vmatprep.subr.mxu0 0.0
    %230 = vmatpush1.msra.mxu0 0.0
    %231 = vmatprep.subr.mxu0 0.0
    %232 = vmatpush1.msra.mxu0 0.0
    %233 = vmatprep.subr.mxu0 0.0
    %234 = vmatpush1.msra.mxu0 0.0
    %235 = vmatprep.subr.mxu0 0.0
    %236 = vmatpush1.msra.mxu0 0.0
    %237 = vmatprep.subr.mxu0 0.0
    %238 = vmatpush1.msra.mxu0 0.0
    %239 = vmatprep.subr.mxu0 0.0
    %240 = vmatpush1.msra.mxu0 0.0
    %241 = vmatprep.subr.mxu0 0.0
    %242 = vmatpush1.msra.mxu0 0.0
    %243 = vmatprep.subr.mxu0 0.0
    %244 = vmatpush1.msra.mxu0 0.0
    %245 = vmatprep.subr.mxu0 0.0
    %246 = vmatpush1.msra.mxu0 0.0
    %247 = vmatprep.mubr.f32.mxu0 0.0
    %248 = vmatmul.mubr.f32.gmra.mrb[0].mxu0 %v103
    %v249 = vpop.f32.mrb[0].mxu0
    %v250 = vadd.f32 0.0, %v249
    %v251 = vpop.f32.mrb[0].mxu0
    %252 = vmatprep.mubr.f32.mxu0 0.0
    %253 = vmatmul.mubr.f32.gmra.mrb[0].mxu0 %v106
    %v254 = vpop.f32.mrb[0].mxu0
    %v255 = vadd.f32 0.0, %v254
    %v256 = vpop.f32.mrb[0].mxu0
    %257 = vdwg.mxu0
    %260 = vrot.lane.b32.xlu0 %v175, 96
    %v261 = vpop.permute.xlu0 %260
    %262 = vrot.lane.b32.xlu0 %v180, 96
    %v263 = vpop.permute.xlu0 %262
    %vm264 = vcmask 64512
    %v265 = vsel %vm264, %v175, 0
    %v267 = vsel %vm264, %v180, 0
    %v269 = vsel %vm264, %v261, 0
    %v271 = vsel %vm264, %v263, 0
    %273 = vmatprep.subr.mxu0 0.0
    %274 = vmatpush1.xpose.msra.mxu0 %v269
    %275 = vmatprep.subr.mxu0 0.0
    %276 = vmatpush1.xpose.msra.mxu0 %v271
    %277 = vmatprep.subr.mxu0 0.0
    %278 = vmatpush1.xpose.msra.mxu0 0.0
    %279 = vmatprep.subr.mxu0 0.0
    %280 = vmatpush1.xpose.msra.mxu0 0.0
    %281 = vmatprep.subr.mxu0 0.0
    %282 = vmatpush1.xpose.msra.mxu0 0.0
    %283 = vmatprep.subr.mxu0 0.0
    %284 = vmatpush1.xpose.msra.mxu0 0.0
    %285 = vmatprep.subr.mxu0 0.0
    %286 = vmatpush1.xpose.msra.mxu0 0.0
    %287 = vmatprep.subr.mxu0 0.0
    %288 = vmatpush1.xpose.msra.mxu0 0.0
    %289 = vmatprep.subr.mxu0 0.0
    %290 = vmatpush1.xpose.msra.mxu0 0.0
    %291 = vmatprep.subr.mxu0 0.0
    %292 = vmatpush1.xpose.msra.mxu0 0.0
    %293 = vmatprep.subr.mxu0 0.0
    %294 = vmatpush1.xpose.msra.mxu0 0.0
    %295 = vmatprep.subr.mxu0 0.0
    %296 = vmatpush1.xpose.msra.mxu0 0.0
    %297 = vmatprep.subr.mxu0 0.0
    %298 = vmatpush1.xpose.msra.mxu0 0.0
    %299 = vmatprep.subr.mxu0 0.0
    %300 = vmatpush1.xpose.msra.mxu0 0.0
    %301 = vmatprep.subr.mxu0 0.0
    %302 = vmatpush1.xpose.msra.mxu0 0.0
    %303 = vmatprep.subr.mxu0 0.0
    %304 = vmatpush1.xpose.msra.mxu0 0.0
    %305 = vmatprep.subr.mxu0 0.0
    %306 = vmatpush1.xpose.msra.mxu0 0.0
    %307 = vmatprep.subr.mxu0 0.0
    %308 = vmatpush1.xpose.msra.mxu0 0.0
    %309 = vmatprep.subr.mxu0 0.0
    %310 = vmatpush1.xpose.msra.mxu0 0.0
    %311 = vmatprep.subr.mxu0 0.0
    %312 = vmatpush1.xpose.msra.mxu0 0.0
    %313 = vmatprep.subr.mxu0 0.0
    %314 = vmatpush1.xpose.msra.mxu0 0.0
    %315 = vmatprep.subr.mxu0 0.0
    %316 = vmatpush1.xpose.msra.mxu0 0.0
    %317 = vmatprep.subr.mxu0 0.0
    %318 = vmatpush1.xpose.msra.mxu0 0.0
    %319 = vmatprep.subr.mxu0 0.0
    %320 = vmatpush1.xpose.msra.mxu0 0.0
    %321 = vmatprep.subr.mxu0 0.0
    %322 = vmatpush1.xpose.msra.mxu0 0.0
    %323 = vmatprep.subr.mxu0 0.0
    %324 = vmatpush1.xpose.msra.mxu0 0.0
    %325 = vmatprep.subr.mxu0 0.0
    %326 = vmatpush1.xpose.msra.mxu0 0.0
    %327 = vmatprep.subr.mxu0 0.0
    %328 = vmatpush1.xpose.msra.mxu0 0.0
    %329 = vmatprep.subr.mxu0 0.0
    %330 = vmatpush1.xpose.msra.mxu0 0.0
    %331 = vmatprep.subr.mxu0 0.0
    %332 = vmatpush1.xpose.msra.mxu0 0.0
    %333 = vmatprep.subr.mxu0 0.0
    %334 = vmatpush1.xpose.msra.mxu0 0.0
    %335 = vmatprep.subr.mxu0 0.0
    %336 = vmatpush1.xpose.msra.mxu0 0.0
    %337 = vmatprep.mubr.f32.mxu0 0.0
    %338 = vmatmul.mubr.f32.gmra.mrb[0].mxu0 %v265
    %v339 = vpop.f32.mrb[0].mxu0
    %v340 = vadd.f32 %v54, %v339
    %v341 = vpop.f32.mrb[0].mxu0
    %342 = vmatprep.mubr.f32.mxu0 0.0
    %343 = vmatmul.mubr.f32.gmra.mrb[0].mxu0 %v267
    %v344 = vpop.f32.mrb[0].mxu0
    %v345 = vadd.f32 %v55, %v344
    %v346 = vpop.f32.mrb[0].mxu0
    %347 = vdwg.mxu0
    %vm348 = vcmask 130048
    %v349 = vsel %vm348, %v340, -inf
    %350 = vmax.xlane.f32.xlu0 %v349
    %v351 = vpop.xlane.xlu0 %350
    %v352 = vsel %vm348, %v345, -inf
    %353 = vmax.xlane.f32.xlu0 %v352
    %v354 = vpop.xlane.xlu0 %353
    %v355 = vsub.f32 %v340, %v351
    %v356 = vsub.f32 %v345, %v354
    %v357 = vmul.f32 %v355, 1.442695
    %v358 = vpow.pop %v357
    %v359 = vmul.f32 %v356, 1.442695
    %v360 = vpow.pop %v359
    %v361 = vsel %vm348, %v358, 0.0
    %362 = vadd.xlane.f32.xlu0 %v361
    %v363 = vpop.xlane.xlu0 %362
    %v364 = vsel %vm348, %v360, 0.0
    %365 = vadd.xlane.f32.xlu0 %v364
    %v366 = vpop.xlane.xlu0 %365
    %v367 = vrcp.pop %v363
    %v368 = vrcp.pop %v366
    %v369 = vmul.f32 %v358, %v367
    %v370 = vmul.f32 %v360, %v368
    %v372 = vsel %vm348, %v369, 0
    %v375 = vsel %vm348, %v370, 0
    %377 = vmatprep.subr.mxu0 0.0
    %378 = vmatpush1.msra.mxu0 %v250
    %379 = vmatprep.subr.mxu0 0.0
    %380 = vmatpush1.msra.mxu0 %v255
    %381 = vmatprep.subr.mxu0 0.0
    %382 = vmatpush1.msra.mxu0 0.0
    %383 = vmatprep.subr.mxu0 0.0
    %384 = vmatpush1.msra.mxu0 0.0
    %385 = vmatprep.subr.mxu0 0.0
    %386 = vmatpush1.msra.mxu0 0.0
    %387 = vmatprep.subr.mxu0 0.0
    %388 = vmatpush1.msra.mxu0 0.0
    %389 = vmatprep.subr.mxu0 0.0
    %390 = vmatpush1.msra.mxu0 0.0
    %391 = vmatprep.subr.mxu0 0.0
    %392 = vmatpush1.msra.mxu0 0.0
    %393 = vmatprep.subr.mxu0 0.0
    %394 = vmatpush1.msra.mxu0 0.0
    %395 = vmatprep.subr.mxu0 0.0
    %396 = vmatpush1.msra.mxu0 0.0
    %397 = vmatprep.subr.mxu0 0.0
    %398 = vmatpush1.msra.mxu0 0.0
    %399 = vmatprep.subr.mxu0 0.0
    %400 = vmatpush1.msra.mxu0 0.0
    %401 = vmatprep.subr.mxu0 0.0
    %402 = vmatpush1.msra.mxu0 0.0
    %403 = vmatprep.subr.mxu0 0.0
    %404 = vmatpush1.msra.mxu0 0.0
    %405 = vmatprep.subr.mxu0 0.0
    %406 = vmatpush1.msra.mxu0 0.0
    %407 = vmatprep.subr.mxu0 0.0
    %408 = vmatpush1.msra.mxu0 0.0
    %409 = vmatprep.subr.mxu0 0.0
    %410 = vmatpush1.msra.mxu0 0.0
    %411 = vmatprep.subr.mxu0 0.0
    %412 = vmatpush1.msra.mxu0 0.0
    %413 = vmatprep.subr.mxu0 0.0
    %414 = vmatpush1.msra.mxu0 0.0
    %415 = vmatprep.subr.mxu0 0.0
    %416 = vmatpush1.msra.mxu0 0.0
    %417 = vmatprep.subr.mxu0 0.0
    %418 = vmatpush1.msra.mxu0 0.0
    %419 = vmatprep.subr.mxu0 0.0
    %420 = vmatpush1.msra.mxu0 0.0
    %421 = vmatprep.subr.mxu0 0.0
    %422 = vmatpush1.msra.mxu0 0.0
    %423 = vmatprep.subr.mxu0 0.0
    %424 = vmatpush1.msra.mxu0 0.0
    %425 = vmatprep.subr.mxu0 0.0
    %426 = vmatpush1.msra.mxu0 0.0
    %427 = vmatprep.subr.mxu0 0.0
    %428 = vmatpush1.msra.mxu0 0.0
    %429 = vmatprep.subr.mxu0 0.0
    %430 = vmatpush1.msra.mxu0 0.0
    %431 = vmatprep.subr.mxu0 0.0
    %432 = vmatpush1.msra.mxu0 0.0
    %433 = vmatprep.subr.mxu0 0.0
    %434 = vmatpush1.msra.mxu0 0.0
    %435 = vmatprep.subr.mxu0 0.0
    %436 = vmatpush1.msra.mxu0 0.0
    %437 = vmatprep.subr.mxu0 0.0
    %438 = vmatpush1.msra.mxu0 0.0
    %439 = vmatprep.subr.mxu0 0.0
    %440 = vmatpush1.msra.mxu0 0.0
    %441 = vmatprep.mubr.f32.mxu0 0.0
    %442 = vmatmul.mubr.f32.gmra.mrb[0].mxu0 %v372
    %v443 = vpop.f32.mrb[0].mxu0
    %v444 = vadd.f32 0.0, %v443
    %v445 = vpop.f32.mrb[0].mxu0
    %446 = vmatprep.mubr.f32.mxu0 0.0
    %447 = vmatmul.mubr.f32.gmra.mrb[0].mxu0 %v375
    %v448 = vpop.f32.mrb[0].mxu0
    %v449 = vadd.f32 0.0, %v448
    %v450 = vpop.f32.mrb[0].mxu0
    %451 = vdwg.mxu0
    %v452 = vlaneseq
    %v453 = vshrl.u32 %v452, 7
    %v454 = vsub.s32 1, %v453
    %v455 = vrot.slane %v39, %v454
    %v456 = vadd.f32 %v455, %v444
    %v457 = vadd.f32 %v455, %v449
    %458 = vrot.lane.b32.xlu0 %v175, 120
    %v459 = vpop.permute.xlu0 %458
    %460 = vrot.lane.b32.xlu0 %v180, 120
    %v461 = vpop.permute.xlu0 %460
    %462 = vrot.lane.b32.xlu0 %v175, 88
    %v463 = vpop.permute.xlu0 %462
    %464 = vrot.lane.b32.xlu0 %v180, 88
    %v465 = vpop.permute.xlu0 %464
    %v466 = vsel %vm264, %v459, 0
    %v468 = vsel %vm264, %v461, 0
    %v470 = vsel %vm264, %v463, 0
    %v472 = vsel %vm264, %v465, 0
    %474 = vmatprep.subr.mxu0 0.0
    %475 = vmatpush1.xpose.msra.mxu0 %v470
    %476 = vmatprep.subr.mxu0 0.0
    %477 = vmatpush1.xpose.msra.mxu0 %v472
    %478 = vmatprep.subr.mxu0 0.0
    %479 = vmatpush1.xpose.msra.mxu0 0.0
    %480 = vmatprep.subr.mxu0 0.0
    %481 = vmatpush1.xpose.msra.mxu0 0.0
    %482 = vmatprep.subr.mxu0 0.0
    %483 = vmatpush1.xpose.msra.mxu0 0.0
    %484 = vmatprep.subr.mxu0 0.0
    %485 = vmatpush1.xpose.msra.mxu0 0.0
    %486 = vmatprep.subr.mxu0 0.0
    %487 = vmatpush1.xpose.msra.mxu0 0.0
    %488 = vmatprep.subr.mxu0 0.0
    %489 = vmatpush1.xpose.msra.mxu0 0.0
    %490 = vmatprep.subr.mxu0 0.0
    %491 = vmatpush1.xpose.msra.mxu0 0.0
    %492 = vmatprep.subr.mxu0 0.0
    %493 = vmatpush1.xpose.msra.mxu0 0.0
    %494 = vmatprep.subr.mxu0 0.0
    %495 = vmatpush1.xpose.msra.mxu0 0.0
    %496 = vmatprep.subr.mxu0 0.0
    %497 = vmatpush1.xpose.msra.mxu0 0.0
    %498 = vmatprep.subr.mxu0 0.0
    %499 = vmatpush1.xpose.msra.mxu0 0.0
    %500 = vmatprep.subr.mxu0 0.0
    %501 = vmatpush1.xpose.msra.mxu0 0.0
    %502 = vmatprep.subr.mxu0 0.0
    %503 = vmatpush1.xpose.msra.mxu0 0.0
    %504 = vmatprep.subr.mxu0 0.0
    %505 = vmatpush1.xpose.msra.mxu0 0.0
    %506 = vmatprep.subr.mxu0 0.0
    %507 = vmatpush1.xpose.msra.mxu0 0.0
    %508 = vmatprep.subr.mxu0 0.0
    %509 = vmatpush1.xpose.msra.mxu0 0.0
    %510 = vmatprep.subr.mxu0 0.0
    %511 = vmatpush1.xpose.msra.mxu0 0.0
    %512 = vmatprep.subr.mxu0 0.0
    %513 = vmatpush1.xpose.msra.mxu0 0.0
    %514 = vmatprep.subr.mxu0 0.0
    %515 = vmatpush1.xpose.msra.mxu0 0.0
    %516 = vmatprep.subr.mxu0 0.0
    %517 = vmatpush1.xpose.msra.mxu0 0.0
    %518 = vmatprep.subr.mxu0 0.0
    %519 = vmatpush1.xpose.msra.mxu0 0.0
    %520 = vmatprep.subr.mxu0 0.0
    %521 = vmatpush1.xpose.msra.mxu0 0.0
    %522 = vmatprep.subr.mxu0 0.0
    %523 = vmatpush1.xpose.msra.mxu0 0.0
    %524 = vmatprep.subr.mxu0 0.0
    %525 = vmatpush1.xpose.msra.mxu0 0.0
    %526 = vmatprep.subr.mxu0 0.0
    %527 = vmatpush1.xpose.msra.mxu0 0.0
    %528 = vmatprep.subr.mxu0 0.0
    %529 = vmatpush1.xpose.msra.mxu0 0.0
    %530 = vmatprep.subr.mxu0 0.0
    %531 = vmatpush1.xpose.msra.mxu0 0.0
    %532 = vmatprep.subr.mxu0 0.0
    %533 = vmatpush1.xpose.msra.mxu0 0.0
    %534 = vmatprep.subr.mxu0 0.0
    %535 = vmatpush1.xpose.msra.mxu0 0.0
    %536 = vmatprep.subr.mxu0 0.0
    %537 = vmatpush1.xpose.msra.mxu0 0.0
    %538 = vmatprep.mubr.f32.mxu0 0.0
    %539 = vmatmul.mubr.f32.gmra.mrb[0].mxu0 %v466
    %v540 = vpop.f32.mrb[0].mxu0
    %v541 = vadd.f32 %v54, %v540
    %v542 = vpop.f32.mrb[0].mxu0
    %543 = vmatprep.mubr.f32.mxu0 0.0
    %544 = vmatmul.mubr.f32.gmra.mrb[0].mxu0 %v468
    %v545 = vpop.f32.mrb[0].mxu0
    %v546 = vadd.f32 %v55, %v545
    %v547 = vpop.f32.mrb[0].mxu0
    %548 = vdwg.mxu0
    %v549 = vsel %vm348, %v541, -inf
    %550 = vmax.xlane.f32.xlu0 %v549
    %v551 = vpop.xlane.xlu0 %550
    %v552 = vsel %vm348, %v546, -inf
    %553 = vmax.xlane.f32.xlu0 %v552
    %v554 = vpop.xlane.xlu0 %553
    %v555 = vsub.f32 %v541, %v551
    %v556 = vsub.f32 %v546, %v554
    %v557 = vmul.f32 %v555, 1.442695
    %v558 = vpow.pop %v557
    %v559 = vmul.f32 %v556, 1.442695
    %v560 = vpow.pop %v559
    %v561 = vsel %vm348, %v558, 0.0
    %562 = vadd.xlane.f32.xlu0 %v561
    %v563 = vpop.xlane.xlu0 %562
    %v564 = vsel %vm348, %v560, 0.0
    %565 = vadd.xlane.f32.xlu0 %v564
    %v566 = vpop.xlane.xlu0 %565
    %v567 = vrcp.pop %v563
    %v568 = vrcp.pop %v566
    %v569 = vmul.f32 %v558, %v567
    %v570 = vmul.f32 %v560, %v568
    %573 = vrot.lane.b32.xlu0 %v250, 96
    %v574 = vpop.permute.xlu0 %573
    %575 = vrot.lane.b32.xlu0 %v255, 96
    %v576 = vpop.permute.xlu0 %575
    %v580 = vsel %vm348, %v569, 0
    %v583 = vsel %vm348, %v570, 0
    %585 = vmatprep.subr.mxu0 0.0
    %586 = vmatpush1.msra.mxu0 %v574
    %587 = vmatprep.subr.mxu0 0.0
    %588 = vmatpush1.msra.mxu0 %v576
    %589 = vmatprep.subr.mxu0 0.0
    %590 = vmatpush1.msra.mxu0 0.0
    %591 = vmatprep.subr.mxu0 0.0
    %592 = vmatpush1.msra.mxu0 0.0
    %593 = vmatprep.subr.mxu0 0.0
    %594 = vmatpush1.msra.mxu0 0.0
    %595 = vmatprep.subr.mxu0 0.0
    %596 = vmatpush1.msra.mxu0 0.0
    %597 = vmatprep.subr.mxu0 0.0
    %598 = vmatpush1.msra.mxu0 0.0
    %599 = vmatprep.subr.mxu0 0.0
    %600 = vmatpush1.msra.mxu0 0.0
    %601 = vmatprep.subr.mxu0 0.0
    %602 = vmatpush1.msra.mxu0 0.0
    %603 = vmatprep.subr.mxu0 0.0
    %604 = vmatpush1.msra.mxu0 0.0
    %605 = vmatprep.subr.mxu0 0.0
    %606 = vmatpush1.msra.mxu0 0.0
    %607 = vmatprep.subr.mxu0 0.0
    %608 = vmatpush1.msra.mxu0 0.0
    %609 = vmatprep.subr.mxu0 0.0
    %610 = vmatpush1.msra.mxu0 0.0
    %611 = vmatprep.subr.mxu0 0.0
    %612 = vmatpush1.msra.mxu0 0.0
    %613 = vmatprep.subr.mxu0 0.0
    %614 = vmatpush1.msra.mxu0 0.0
    %615 = vmatprep.subr.mxu0 0.0
    %616 = vmatpush1.msra.mxu0 0.0
    %617 = vmatprep.subr.mxu0 0.0
    %618 = vmatpush1.msra.mxu0 0.0
    %619 = vmatprep.subr.mxu0 0.0
    %620 = vmatpush1.msra.mxu0 0.0
    %621 = vmatprep.subr.mxu0 0.0
    %622 = vmatpush1.msra.mxu0 0.0
    %623 = vmatprep.subr.mxu0 0.0
    %624 = vmatpush1.msra.mxu0 0.0
    %625 = vmatprep.subr.mxu0 0.0
    %626 = vmatpush1.msra.mxu0 0.0
    %627 = vmatprep.subr.mxu0 0.0
    %628 = vmatpush1.msra.mxu0 0.0
    %629 = vmatprep.subr.mxu0 0.0
    %630 = vmatpush1.msra.mxu0 0.0
    %631 = vmatprep.subr.mxu0 0.0
    %632 = vmatpush1.msra.mxu0 0.0
    %633 = vmatprep.subr.mxu0 0.0
    %634 = vmatpush1.msra.mxu0 0.0
    %635 = vmatprep.subr.mxu0 0.0
    %636 = vmatpush1.msra.mxu0 0.0
    %637 = vmatprep.subr.mxu0 0.0
    %638 = vmatpush1.msra.mxu0 0.0
    %639 = vmatprep.subr.mxu0 0.0
    %640 = vmatpush1.msra.mxu0 0.0
    %641 = vmatprep.subr.mxu0 0.0
    %642 = vmatpush1.msra.mxu0 0.0
    %643 = vmatprep.subr.mxu0 0.0
    %644 = vmatpush1.msra.mxu0 0.0
    %645 = vmatprep.subr.mxu0 0.0
    %646 = vmatpush1.msra.mxu0 0.0
    %647 = vmatprep.subr.mxu0 0.0
    %648 = vmatpush1.msra.mxu0 0.0
    %649 = vmatprep.mubr.f32.mxu0 0.0
    %650 = vmatmul.mubr.f32.gmra.mrb[0].mxu0 %v580
    %v651 = vpop.f32.mrb[0].mxu0
    %v652 = vadd.f32 0.0, %v651
    %v653 = vpop.f32.mrb[0].mxu0
    %654 = vmatprep.mubr.f32.mxu0 0.0
    %655 = vmatmul.mubr.f32.gmra.mrb[0].mxu0 %v583
    %v656 = vpop.f32.mrb[0].mxu0
    %v657 = vadd.f32 0.0, %v656
    %v658 = vpop.f32.mrb[0].mxu0
    %659 = vdwg.mxu0
    %v660 = vadd.f32 %v456, %v652
    %v661 = vadd.f32 %v457, %v657
    %662 = vrot.lane.b32.xlu0 %v175, 112
    %v663 = vpop.permute.xlu0 %662
    %664 = vrot.lane.b32.xlu0 %v180, 112
    %v665 = vpop.permute.xlu0 %664
    %666 = vrot.lane.b32.xlu0 %v175, 80
    %v667 = vpop.permute.xlu0 %666
    %668 = vrot.lane.b32.xlu0 %v180, 80
    %v669 = vpop.permute.xlu0 %668
    %v670 = vsel %vm264, %v663, 0
    %v672 = vsel %vm264, %v665, 0
    %v674 = vsel %vm264, %v667, 0
    %v676 = vsel %vm264, %v669, 0
    %678 = vmatprep.subr.mxu0 0.0
    %679 = vmatpush1.xpose.msra.mxu0 %v674
    %680 = vmatprep.subr.mxu0 0.0
    %681 = vmatpush1.xpose.msra.mxu0 %v676
    %682 = vmatprep.subr.mxu0 0.0
    %683 = vmatpush1.xpose.msra.mxu0 0.0
    %684 = vmatprep.subr.mxu0 0.0
    %685 = vmatpush1.xpose.msra.mxu0 0.0
    %686 = vmatprep.subr.mxu0 0.0
    %687 = vmatpush1.xpose.msra.mxu0 0.0
    %688 = vmatprep.subr.mxu0 0.0
    %689 = vmatpush1.xpose.msra.mxu0 0.0
    %690 = vmatprep.subr.mxu0 0.0
    %691 = vmatpush1.xpose.msra.mxu0 0.0
    %692 = vmatprep.subr.mxu0 0.0
    %693 = vmatpush1.xpose.msra.mxu0 0.0
    %694 = vmatprep.subr.mxu0 0.0
    %695 = vmatpush1.xpose.msra.mxu0 0.0
    %696 = vmatprep.subr.mxu0 0.0
    %697 = vmatpush1.xpose.msra.mxu0 0.0
    %698 = vmatprep.subr.mxu0 0.0
    %699 = vmatpush1.xpose.msra.mxu0 0.0
    %700 = vmatprep.subr.mxu0 0.0
    %701 = vmatpush1.xpose.msra.mxu0 0.0
    %702 = vmatprep.subr.mxu0 0.0
    %703 = vmatpush1.xpose.msra.mxu0 0.0
    %704 = vmatprep.subr.mxu0 0.0
    %705 = vmatpush1.xpose.msra.mxu0 0.0
    %706 = vmatprep.subr.mxu0 0.0
    %707 = vmatpush1.xpose.msra.mxu0 0.0
    %708 = vmatprep.subr.mxu0 0.0
    %709 = vmatpush1.xpose.msra.mxu0 0.0
    %710 = vmatprep.subr.mxu0 0.0
    %711 = vmatpush1.xpose.msra.mxu0 0.0
    %712 = vmatprep.subr.mxu0 0.0
    %713 = vmatpush1.xpose.msra.mxu0 0.0
    %714 = vmatprep.subr.mxu0 0.0
    %715 = vmatpush1.xpose.msra.mxu0 0.0
    %716 = vmatprep.subr.mxu0 0.0
    %717 = vmatpush1.xpose.msra.mxu0 0.0
    %718 = vmatprep.subr.mxu0 0.0
    %719 = vmatpush1.xpose.msra.mxu0 0.0
    %720 = vmatprep.subr.mxu0 0.0
    %721 = vmatpush1.xpose.msra.mxu0 0.0
    %722 = vmatprep.subr.mxu0 0.0
    %723 = vmatpush1.xpose.msra.mxu0 0.0
    %724 = vmatprep.subr.mxu0 0.0
    %725 = vmatpush1.xpose.msra.mxu0 0.0
    %726 = vmatprep.subr.mxu0 0.0
    %727 = vmatpush1.xpose.msra.mxu0 0.0
    %728 = vmatprep.subr.mxu0 0.0
    %729 = vmatpush1.xpose.msra.mxu0 0.0
    %730 = vmatprep.subr.mxu0 0.0
    %731 = vmatpush1.xpose.msra.mxu0 0.0
    %732 = vmatprep.subr.mxu0 0.0
    %733 = vmatpush1.xpose.msra.mxu0 0.0
    %734 = vmatprep.subr.mxu0 0.0
    %735 = vmatpush1.xpose.msra.mxu0 0.0
    %736 = vmatprep.subr.mxu0 0.0
    %737 = vmatpush1.xpose.msra.mxu0 0.0
    %738 = vmatprep.subr.mxu0 0.0
    %739 = vmatpush1.xpose.msra.mxu0 0.0
    %740 = vmatprep.subr.mxu0 0.0
    %741 = vmatpush1.xpose.msra.mxu0 0.0
    %742 = vmatprep.mubr.f32.mxu0 0.0
    %743 = vmatmul.mubr.f32.gmra.mrb[0].mxu0 %v670
    %v744 = vpop.f32.mrb[0].mxu0
    %v745 = vadd.f32 %v54, %v744
    %v746 = vpop.f32.mrb[0].mxu0
    %747 = vmatprep.mubr.f32.mxu0 0.0
    %748 = vmatmul.mubr.f32.gmra.mrb[0].mxu0 %v672
    %v749 = vpop.f32.mrb[0].mxu0
    %v750 = vadd.f32 %v55, %v749
    %v751 = vpop.f32.mrb[0].mxu0
    %752 = vdwg.mxu0
    %v753 = vsel %vm348, %v745, -inf
    %754 = vmax.xlane.f32.xlu0 %v753
    %v755 = vpop.xlane.xlu0 %754
    %v756 = vsel %vm348, %v750, -inf
    %757 = vmax.xlane.f32.xlu0 %v756
    %v758 = vpop.xlane.xlu0 %757
    %v759 = vsub.f32 %v745, %v755
    %v760 = vsub.f32 %v750, %v758
    %v761 = vmul.f32 %v759, 1.442695
    %v762 = vpow.pop %v761
    %v763 = vmul.f32 %v760, 1.442695
    %v764 = vpow.pop %v763
    %v765 = vsel %vm348, %v762, 0.0
    %766 = vadd.xlane.f32.xlu0 %v765
    %v767 = vpop.xlane.xlu0 %766
    %v768 = vsel %vm348, %v764, 0.0
    %769 = vadd.xlane.f32.xlu0 %v768
    %v770 = vpop.xlane.xlu0 %769
    %v771 = vrcp.pop %v767
    %v772 = vrcp.pop %v770
    %v773 = vmul.f32 %v762, %v771
    %v774 = vmul.f32 %v764, %v772
    %775 = vrot.lane.b32.xlu0 %v250, 64
    %v776 = vpop.permute.xlu0 %775
    %777 = vrot.lane.b32.xlu0 %v255, 64
    %v778 = vpop.permute.xlu0 %777
    %v782 = vsel %vm348, %v773, 0
    %v785 = vsel %vm348, %v774, 0
    %787 = vmatprep.subr.mxu0 0.0
    %788 = vmatpush1.msra.mxu0 %v776
    %789 = vmatprep.subr.mxu0 0.0
    %790 = vmatpush1.msra.mxu0 %v778
    %791 = vmatprep.subr.mxu0 0.0
    %792 = vmatpush1.msra.mxu0 0.0
    %793 = vmatprep.subr.mxu0 0.0
    %794 = vmatpush1.msra.mxu0 0.0
    %795 = vmatprep.subr.mxu0 0.0
    %796 = vmatpush1.msra.mxu0 0.0
    %797 = vmatprep.subr.mxu0 0.0
    %798 = vmatpush1.msra.mxu0 0.0
    %799 = vmatprep.subr.mxu0 0.0
    %800 = vmatpush1.msra.mxu0 0.0
    %801 = vmatprep.subr.mxu0 0.0
    %802 = vmatpush1.msra.mxu0 0.0
    %803 = vmatprep.subr.mxu0 0.0
    %804 = vmatpush1.msra.mxu0 0.0
    %805 = vmatprep.subr.mxu0 0.0
    %806 = vmatpush1.msra.mxu0 0.0
    %807 = vmatprep.subr.mxu0 0.0
    %808 = vmatpush1.msra.mxu0 0.0
    %809 = vmatprep.subr.mxu0 0.0
    %810 = vmatpush1.msra.mxu0 0.0
    %811 = vmatprep.subr.mxu0 0.0
    %812 = vmatpush1.msra.mxu0 0.0
    %813 = vmatprep.subr.mxu0 0.0
    %814 = vmatpush1.msra.mxu0 0.0
    %815 = vmatprep.subr.mxu0 0.0
    %816 = vmatpush1.msra.mxu0 0.0
    %817 = vmatprep.subr.mxu0 0.0
    %818 = vmatpush1.msra.mxu0 0.0
    %819 = vmatprep.subr.mxu0 0.0
    %820 = vmatpush1.msra.mxu0 0.0
    %821 = vmatprep.subr.mxu0 0.0
    %822 = vmatpush1.msra.mxu0 0.0
    %823 = vmatprep.subr.mxu0 0.0
    %824 = vmatpush1.msra.mxu0 0.0
    %825 = vmatprep.subr.mxu0 0.0
    %826 = vmatpush1.msra.mxu0 0.0
    %827 = vmatprep.subr.mxu0 0.0
    %828 = vmatpush1.msra.mxu0 0.0
    %829 = vmatprep.subr.mxu0 0.0
    %830 = vmatpush1.msra.mxu0 0.0
    %831 = vmatprep.subr.mxu0 0.0
    %832 = vmatpush1.msra.mxu0 0.0
    %833 = vmatprep.subr.mxu0 0.0
    %834 = vmatpush1.msra.mxu0 0.0
    %835 = vmatprep.subr.mxu0 0.0
    %836 = vmatpush1.msra.mxu0 0.0
    %837 = vmatprep.subr.mxu0 0.0
    %838 = vmatpush1.msra.mxu0 0.0
    %839 = vmatprep.subr.mxu0 0.0
    %840 = vmatpush1.msra.mxu0 0.0
    %841 = vmatprep.subr.mxu0 0.0
    %842 = vmatpush1.msra.mxu0 0.0
    %843 = vmatprep.subr.mxu0 0.0
    %844 = vmatpush1.msra.mxu0 0.0
    %845 = vmatprep.subr.mxu0 0.0
    %846 = vmatpush1.msra.mxu0 0.0
    %847 = vmatprep.subr.mxu0 0.0
    %848 = vmatpush1.msra.mxu0 0.0
    %849 = vmatprep.subr.mxu0 0.0
    %850 = vmatpush1.msra.mxu0 0.0
    %851 = vmatprep.mubr.f32.mxu0 0.0
    %852 = vmatmul.mubr.f32.gmra.mrb[0].mxu0 %v782
    %v853 = vpop.f32.mrb[0].mxu0
    %v854 = vadd.f32 0.0, %v853
    %v855 = vpop.f32.mrb[0].mxu0
    %856 = vmatprep.mubr.f32.mxu0 0.0
    %857 = vmatmul.mubr.f32.gmra.mrb[0].mxu0 %v785
    %v858 = vpop.f32.mrb[0].mxu0
    %v859 = vadd.f32 0.0, %v858
    %v860 = vpop.f32.mrb[0].mxu0
    %861 = vdwg.mxu0
    %v862 = vadd.f32 %v660, %v854
    %v863 = vadd.f32 %v661, %v859
    %864 = vrot.lane.b32.xlu0 %v175, 104
    %v865 = vpop.permute.xlu0 %864
    %866 = vrot.lane.b32.xlu0 %v180, 104
    %v867 = vpop.permute.xlu0 %866
    %868 = vrot.lane.b32.xlu0 %v175, 72
    %v869 = vpop.permute.xlu0 %868
    %870 = vrot.lane.b32.xlu0 %v180, 72
    %v871 = vpop.permute.xlu0 %870
    %v872 = vsel %vm264, %v865, 0
    %v874 = vsel %vm264, %v867, 0
    %v876 = vsel %vm264, %v869, 0
    %v878 = vsel %vm264, %v871, 0
    %880 = vmatprep.subr.mxu0 0.0
    %881 = vmatpush1.xpose.msra.mxu0 %v876
    %882 = vmatprep.subr.mxu0 0.0
    %883 = vmatpush1.xpose.msra.mxu0 %v878
    %884 = vmatprep.subr.mxu0 0.0
    %885 = vmatpush1.xpose.msra.mxu0 0.0
    %886 = vmatprep.subr.mxu0 0.0
    %887 = vmatpush1.xpose.msra.mxu0 0.0
    %888 = vmatprep.subr.mxu0 0.0
    %889 = vmatpush1.xpose.msra.mxu0 0.0
    %890 = vmatprep.subr.mxu0 0.0
    %891 = vmatpush1.xpose.msra.mxu0 0.0
    %892 = vmatprep.subr.mxu0 0.0
    %893 = vmatpush1.xpose.msra.mxu0 0.0
    %894 = vmatprep.subr.mxu0 0.0
    %895 = vmatpush1.xpose.msra.mxu0 0.0
    %896 = vmatprep.subr.mxu0 0.0
    %897 = vmatpush1.xpose.msra.mxu0 0.0
    %898 = vmatprep.subr.mxu0 0.0
    %899 = vmatpush1.xpose.msra.mxu0 0.0
    %900 = vmatprep.subr.mxu0 0.0
    %901 = vmatpush1.xpose.msra.mxu0 0.0
    %902 = vmatprep.subr.mxu0 0.0
    %903 = vmatpush1.xpose.msra.mxu0 0.0
    %904 = vmatprep.subr.mxu0 0.0
    %905 = vmatpush1.xpose.msra.mxu0 0.0
    %906 = vmatprep.subr.mxu0 0.0
    %907 = vmatpush1.xpose.msra.mxu0 0.0
    %908 = vmatprep.subr.mxu0 0.0
    %909 = vmatpush1.xpose.msra.mxu0 0.0
    %910 = vmatprep.subr.mxu0 0.0
    %911 = vmatpush1.xpose.msra.mxu0 0.0
    %912 = vmatprep.subr.mxu0 0.0
    %913 = vmatpush1.xpose.msra.mxu0 0.0
    %914 = vmatprep.subr.mxu0 0.0
    %915 = vmatpush1.xpose.msra.mxu0 0.0
    %916 = vmatprep.subr.mxu0 0.0
    %917 = vmatpush1.xpose.msra.mxu0 0.0
    %918 = vmatprep.subr.mxu0 0.0
    %919 = vmatpush1.xpose.msra.mxu0 0.0
    %920 = vmatprep.subr.mxu0 0.0
    %921 = vmatpush1.xpose.msra.mxu0 0.0
    %922 = vmatprep.subr.mxu0 0.0
    %923 = vmatpush1.xpose.msra.mxu0 0.0
    %924 = vmatprep.subr.mxu0 0.0
    %925 = vmatpush1.xpose.msra.mxu0 0.0
    %926 = vmatprep.subr.mxu0 0.0
    %927 = vmatpush1.xpose.msra.mxu0 0.0
    %928 = vmatprep.subr.mxu0 0.0
    %929 = vmatpush1.xpose.msra.mxu0 0.0
    %930 = vmatprep.subr.mxu0 0.0
    %931 = vmatpush1.xpose.msra.mxu0 0.0
    %932 = vmatprep.subr.mxu0 0.0
    %933 = vmatpush1.xpose.msra.mxu0 0.0
    %934 = vmatprep.subr.mxu0 0.0
    %935 = vmatpush1.xpose.msra.mxu0 0.0
    %936 = vmatprep.subr.mxu0 0.0
    %937 = vmatpush1.xpose.msra.mxu0 0.0
    %938 = vmatprep.subr.mxu0 0.0
    %939 = vmatpush1.xpose.msra.mxu0 0.0
    %940 = vmatprep.subr.mxu0 0.0
    %941 = vmatpush1.xpose.msra.mxu0 0.0
    %942 = vmatprep.subr.mxu0 0.0
    %943 = vmatpush1.xpose.msra.mxu0 0.0
    %944 = vmatprep.mubr.f32.mxu0 0.0
    %945 = vmatmul.mubr.f32.gmra.mrb[0].mxu0 %v872
    %v946 = vpop.f32.mrb[0].mxu0
    %v947 = vadd.f32 %v54, %v946
    %v948 = vpop.f32.mrb[0].mxu0
    %949 = vmatprep.mubr.f32.mxu0 0.0
    %950 = vmatmul.mubr.f32.gmra.mrb[0].mxu0 %v874
    %v951 = vpop.f32.mrb[0].mxu0
    %v952 = vadd.f32 %v55, %v951
    %v953 = vpop.f32.mrb[0].mxu0
    %954 = vdwg.mxu0
    %v955 = vsel %vm348, %v947, -inf
    %956 = vmax.xlane.f32.xlu0 %v955
    %v957 = vpop.xlane.xlu0 %956
    %v958 = vsel %vm348, %v952, -inf
    %959 = vmax.xlane.f32.xlu0 %v958
    %v960 = vpop.xlane.xlu0 %959
    %v961 = vsub.f32 %v947, %v957
    %v962 = vsub.f32 %v952, %v960
    %v963 = vmul.f32 %v961, 1.442695
    %v964 = vpow.pop %v963
    %v965 = vmul.f32 %v962, 1.442695
    %v966 = vpow.pop %v965
    %v967 = vsel %vm348, %v964, 0.0
    %968 = vadd.xlane.f32.xlu0 %v967
    %v969 = vpop.xlane.xlu0 %968
    %v970 = vsel %vm348, %v966, 0.0
    %971 = vadd.xlane.f32.xlu0 %v970
    %v972 = vpop.xlane.xlu0 %971
    %v973 = vrcp.pop %v969
    %v974 = vrcp.pop %v972
    %v975 = vmul.f32 %v964, %v973
    %v976 = vmul.f32 %v966, %v974
    %977 = vrot.lane.b32.xlu0 %v250, 32
    %v978 = vpop.permute.xlu0 %977
    %979 = vrot.lane.b32.xlu0 %v255, 32
    %v980 = vpop.permute.xlu0 %979
    %v984 = vsel %vm348, %v975, 0
    %v987 = vsel %vm348, %v976, 0
    %989 = vmatprep.subr.mxu0 0.0
    %990 = vmatpush1.msra.mxu0 %v978
    %991 = vmatprep.subr.mxu0 0.0
    %992 = vmatpush1.msra.mxu0 %v980
    %993 = vmatprep.subr.mxu0 0.0
    %994 = vmatpush1.msra.mxu0 0.0
    %995 = vmatprep.subr.mxu0 0.0
    %996 = vmatpush1.msra.mxu0 0.0
    %997 = vmatprep.subr.mxu0 0.0
    %998 = vmatpush1.msra.mxu0 0.0
    %999 = vmatprep.subr.mxu0 0.0
    %1000 = vmatpush1.msra.mxu0 0.0
    %1001 = vmatprep.subr.mxu0 0.0
    %1002 = vmatpush1.msra.mxu0 0.0
    %1003 = vmatprep.subr.mxu0 0.0
    %1004 = vmatpush1.msra.mxu0 0.0
    %1005 = vmatprep.subr.mxu0 0.0
    %1006 = vmatpush1.msra.mxu0 0.0
    %1007 = vmatprep.subr.mxu0 0.0
    %1008 = vmatpush1.msra.mxu0 0.0
    %1009 = vmatprep.subr.mxu0 0.0
    %1010 = vmatpush1.msra.mxu0 0.0
    %1011 = vmatprep.subr.mxu0 0.0
    %1012 = vmatpush1.msra.mxu0 0.0
    %1013 = vmatprep.subr.mxu0 0.0
    %1014 = vmatpush1.msra.mxu0 0.0
    %1015 = vmatprep.subr.mxu0 0.0
    %1016 = vmatpush1.msra.mxu0 0.0
    %1017 = vmatprep.subr.mxu0 0.0
    %1018 = vmatpush1.msra.mxu0 0.0
    %1019 = vmatprep.subr.mxu0 0.0
    %1020 = vmatpush1.msra.mxu0 0.0
    %1021 = vmatprep.subr.mxu0 0.0
    %1022 = vmatpush1.msra.mxu0 0.0
    %1023 = vmatprep.subr.mxu0 0.0
    %1024 = vmatpush1.msra.mxu0 0.0
    %1025 = vmatprep.subr.mxu0 0.0
    %1026 = vmatpush1.msra.mxu0 0.0
    %1027 = vmatprep.subr.mxu0 0.0
    %1028 = vmatpush1.msra.mxu0 0.0
    %1029 = vmatprep.subr.mxu0 0.0
    %1030 = vmatpush1.msra.mxu0 0.0
    %1031 = vmatprep.subr.mxu0 0.0
    %1032 = vmatpush1.msra.mxu0 0.0
    %1033 = vmatprep.subr.mxu0 0.0
    %1034 = vmatpush1.msra.mxu0 0.0
    %1035 = vmatprep.subr.mxu0 0.0
    %1036 = vmatpush1.msra.mxu0 0.0
    %1037 = vmatprep.subr.mxu0 0.0
    %1038 = vmatpush1.msra.mxu0 0.0
    %1039 = vmatprep.subr.mxu0 0.0
    %1040 = vmatpush1.msra.mxu0 0.0
    %1041 = vmatprep.subr.mxu0 0.0
    %1042 = vmatpush1.msra.mxu0 0.0
    %1043 = vmatprep.subr.mxu0 0.0
    %1044 = vmatpush1.msra.mxu0 0.0
    %1045 = vmatprep.subr.mxu0 0.0
    %1046 = vmatpush1.msra.mxu0 0.0
    %1047 = vmatprep.subr.mxu0 0.0
    %1048 = vmatpush1.msra.mxu0 0.0
    %1049 = vmatprep.subr.mxu0 0.0
    %1050 = vmatpush1.msra.mxu0 0.0
    %1051 = vmatprep.subr.mxu0 0.0
    %1052 = vmatpush1.msra.mxu0 0.0
    %1053 = vmatprep.mubr.f32.mxu0 0.0
    %1054 = vmatmul.mubr.f32.gmra.mrb[0].mxu0 %v984
    %v1055 = vpop.f32.mrb[0].mxu0
    %v1056 = vadd.f32 0.0, %v1055
    %v1057 = vpop.f32.mrb[0].mxu0
    %1058 = vmatprep.mubr.f32.mxu0 0.0
    %1059 = vmatmul.mubr.f32.gmra.mrb[0].mxu0 %v987
    %v1060 = vpop.f32.mrb[0].mxu0
    %v1061 = vadd.f32 0.0, %v1060
    %v1062 = vpop.f32.mrb[0].mxu0
    %1063 = vdwg.mxu0
    %v1064 = vadd.f32 %v862, %v1056
    %v1065 = vadd.f32 %v863, %v1061
    %v1066 = vadd.f32 %v15, %v1064
    %v1067 = vadd.f32 %v16, %v1065
    %v1068 = vsel %vm58, %v1066, 0.0
    %1069 = vadd.xlane.f32.xlu0 %v1068
    %v1070 = vpop.xlane.xlu0 %1069
    %v1071 = vsel %vm58, %v1067, 0.0
    %1072 = vadd.xlane.f32.xlu0 %v1071
    %v1073 = vpop.xlane.xlu0 %1072
    %v1074 = vmul.f32 %v1070, %v65
    %v1075 = vmul.f32 %v1073, %v65
    %v1076 = vsub.f32 %v1066, %v1074
    %v1077 = vsub.f32 %v1067, %v1075
    %v1078 = vmul.f32 %v1076, %v1076
    %v1079 = vmul.f32 %v1077, %v1077
    %v1080 = vsel %vm58, %v1078, 0.0
    %1081 = vadd.xlane.f32.xlu0 %v1080
    %v1082 = vpop.xlane.xlu0 %1081
    %v1083 = vsel %vm58, %v1079, 0.0
    %1084 = vadd.xlane.f32.xlu0 %v1083
    %v1085 = vpop.xlane.xlu0 %1084
    %v1086 = vmul.f32 %v1082, %v65
    %v1087 = vmul.f32 %v1085, %v65
    %v1088 = vadd.f32 %v1086, 1e-05
    %v1089 = vadd.f32 %v1087, 1e-05
    %v1090 = vrsqrt.pop %v1088
    %v1091 = vrsqrt.pop %v1089
    %v1092 = vmul.f32 %v1076, %v1090
    %v1093 = vmul.f32 %v1077, %v1091
    %1094 = vrot.lane.b32.xlu0 %v89, 64
    %v1095 = vpop.permute.xlu0 %1094
    %v1097 = vmul.f32 %v1092, %v1095
    %v1098 = vmul.f32 %v1093, %v1095
    %1099 = vrot.lane.b32.xlu0 %v89, 32
    %v1100 = vpop.permute.xlu0 %1099
    %v1102 = vadd.f32 %v1097, %v1100
    %v1103 = vadd.f32 %v1098, %v1100
    %1108 = vrot.lane.b32.xlu0 %v19, 64
    %v1109 = vpop.permute.xlu0 %1108
    %1110 = vrot.lane.b32.xlu0 %v20, 64
    %v1111 = vpop.permute.xlu0 %1110
    %1112 = vrot.lane.b32.xlu0 %v21, 64
    %v1113 = vpop.permute.xlu0 %1112
    %1114 = vrot.lane.b32.xlu0 %v22, 64
    %v1115 = vpop.permute.xlu0 %1114
    %1121 = vrot.lane.b32.xlu0 %v101, 64
    %v1122 = vpop.permute.xlu0 %1121
    %v1125 = vsel %vm58, %v1102, 0
    %v1128 = vsel %vm58, %v1103, 0
    %1130 = vmatprep.subr.mxu0 0.0
    %1131 = vmatpush1.msra.mxu0 %v1109
    %1132 = vmatprep.subr.mxu0 0.0
    %1133 = vmatpush1.msra.mxu0 %v1111
    %1134 = vmatprep.subr.mxu0 0.0
    %1135 = vmatpush1.msra.mxu0 %v1113
    %1136 = vmatprep.subr.mxu0 0.0
    %1137 = vmatpush1.msra.mxu0 %v1115
    %1138 = vmatprep.subr.mxu0 0.0
    %1139 = vmatpush1.msra.mxu0 0.0
    %1140 = vmatprep.subr.mxu0 0.0
    %1141 = vmatpush1.msra.mxu0 0.0
    %1142 = vmatprep.subr.mxu0 0.0
    %1143 = vmatpush1.msra.mxu0 0.0
    %1144 = vmatprep.subr.mxu0 0.0
    %1145 = vmatpush1.msra.mxu0 0.0
    %1146 = vmatprep.subr.mxu0 0.0
    %1147 = vmatpush1.msra.mxu0 0.0
    %1148 = vmatprep.subr.mxu0 0.0
    %1149 = vmatpush1.msra.mxu0 0.0
    %1150 = vmatprep.subr.mxu0 0.0
    %1151 = vmatpush1.msra.mxu0 0.0
    %1152 = vmatprep.subr.mxu0 0.0
    %1153 = vmatpush1.msra.mxu0 0.0
    %1154 = vmatprep.subr.mxu0 0.0
    %1155 = vmatpush1.msra.mxu0 0.0
    %1156 = vmatprep.subr.mxu0 0.0
    %1157 = vmatpush1.msra.mxu0 0.0
    %1158 = vmatprep.subr.mxu0 0.0
    %1159 = vmatpush1.msra.mxu0 0.0
    %1160 = vmatprep.subr.mxu0 0.0
    %1161 = vmatpush1.msra.mxu0 0.0
    %1162 = vmatprep.subr.mxu0 0.0
    %1163 = vmatpush1.msra.mxu0 0.0
    %1164 = vmatprep.subr.mxu0 0.0
    %1165 = vmatpush1.msra.mxu0 0.0
    %1166 = vmatprep.subr.mxu0 0.0
    %1167 = vmatpush1.msra.mxu0 0.0
    %1168 = vmatprep.subr.mxu0 0.0
    %1169 = vmatpush1.msra.mxu0 0.0
    %1170 = vmatprep.subr.mxu0 0.0
    %1171 = vmatpush1.msra.mxu0 0.0
    %1172 = vmatprep.subr.mxu0 0.0
    %1173 = vmatpush1.msra.mxu0 0.0
    %1174 = vmatprep.subr.mxu0 0.0
    %1175 = vmatpush1.msra.mxu0 0.0
    %1176 = vmatprep.subr.mxu0 0.0
    %1177 = vmatpush1.msra.mxu0 0.0
    %1178 = vmatprep.subr.mxu0 0.0
    %1179 = vmatpush1.msra.mxu0 0.0
    %1180 = vmatprep.subr.mxu0 0.0
    %1181 = vmatpush1.msra.mxu0 0.0
    %1182 = vmatprep.subr.mxu0 0.0
    %1183 = vmatpush1.msra.mxu0 0.0
    %1184 = vmatprep.subr.mxu0 0.0
    %1185 = vmatpush1.msra.mxu0 0.0
    %1186 = vmatprep.subr.mxu0 0.0
    %1187 = vmatpush1.msra.mxu0 0.0
    %1188 = vmatprep.subr.mxu0 0.0
    %1189 = vmatpush1.msra.mxu0 0.0
    %1190 = vmatprep.subr.mxu0 0.0
    %1191 = vmatpush1.msra.mxu0 0.0
    %1192 = vmatprep.subr.mxu0 0.0
    %1193 = vmatpush1.msra.mxu0 0.0
    %1194 = vmatprep.mubr.f32.mxu0 0.0
    %1195 = vmatmul.mubr.f32.gmra.mrb[0].mxu0 %v1125
    %v1196 = vpop.f32.mrb[0].mxu0
    %v1197 = vadd.f32 %v1122, %v1196
    %v1198 = vpop.f32.mrb[0].mxu0
    %1199 = vmatprep.mubr.f32.mxu0 0.0
    %1200 = vmatmul.mubr.f32.gmra.mrb[0].mxu0 %v1128
    %v1201 = vpop.f32.mrb[0].mxu0
    %v1202 = vadd.f32 %v1122, %v1201
    %v1203 = vpop.f32.mrb[0].mxu0
    %1204 = vdwg.mxu0
    %1205 = vrot.lane.b32.xlu0 %v19, 32
    %v1206 = vpop.permute.xlu0 %1205
    %1207 = vrot.lane.b32.xlu0 %v20, 32
    %v1208 = vpop.permute.xlu0 %1207
    %1209 = vrot.lane.b32.xlu0 %v21, 32
    %v1210 = vpop.permute.xlu0 %1209
    %1211 = vrot.lane.b32.xlu0 %v22, 32
    %v1212 = vpop.permute.xlu0 %1211
    %1217 = vrot.lane.b32.xlu0 %v101, 32
    %v1218 = vpop.permute.xlu0 %1217
    %v1221 = vsel %vm58, %v17, 0
    %v1224 = vsel %vm58, %v18, 0
    %1226 = vmatprep.subr.mxu0 0.0
    %1227 = vmatpush1.msra.mxu0 %v1206
    %1228 = vmatprep.subr.mxu0 0.0
    %1229 = vmatpush1.msra.mxu0 %v1208
    %1230 = vmatprep.subr.mxu0 0.0
    %1231 = vmatpush1.msra.mxu0 %v1210
    %1232 = vmatprep.subr.mxu0 0.0
    %1233 = vmatpush1.msra.mxu0 %v1212
    %1234 = vmatprep.subr.mxu0 0.0
    %1235 = vmatpush1.msra.mxu0 0.0
    %1236 = vmatprep.subr.mxu0 0.0
    %1237 = vmatpush1.msra.mxu0 0.0
    %1238 = vmatprep.subr.mxu0 0.0
    %1239 = vmatpush1.msra.mxu0 0.0
    %1240 = vmatprep.subr.mxu0 0.0
    %1241 = vmatpush1.msra.mxu0 0.0
    %1242 = vmatprep.subr.mxu0 0.0
    %1243 = vmatpush1.msra.mxu0 0.0
    %1244 = vmatprep.subr.mxu0 0.0
    %1245 = vmatpush1.msra.mxu0 0.0
    %1246 = vmatprep.subr.mxu0 0.0
    %1247 = vmatpush1.msra.mxu0 0.0
    %1248 = vmatprep.subr.mxu0 0.0
    %1249 = vmatpush1.msra.mxu0 0.0
    %1250 = vmatprep.subr.mxu0 0.0
    %1251 = vmatpush1.msra.mxu0 0.0
    %1252 = vmatprep.subr.mxu0 0.0
    %1253 = vmatpush1.msra.mxu0 0.0
    %1254 = vmatprep.subr.mxu0 0.0
    %1255 = vmatpush1.msra.mxu0 0.0
    %1256 = vmatprep.subr.mxu0 0.0
    %1257 = vmatpush1.msra.mxu0 0.0
    %1258 = vmatprep.subr.mxu0 0.0
    %1259 = vmatpush1.msra.mxu0 0.0
    %1260 = vmatprep.subr.mxu0 0.0
    %1261 = vmatpush1.msra.mxu0 0.0
    %1262 = vmatprep.subr.mxu0 0.0
    %1263 = vmatpush1.msra.mxu0 0.0
    %1264 = vmatprep.subr.mxu0 0.0
    %1265 = vmatpush1.msra.mxu0 0.0
    %1266 = vmatprep.subr.mxu0 0.0
    %1267 = vmatpush1.msra.mxu0 0.0
    %1268 = vmatprep.subr.mxu0 0.0
    %1269 = vmatpush1.msra.mxu0 0.0
    %1270 = vmatprep.subr.mxu0 0.0
    %1271 = vmatpush1.msra.mxu0 0.0
    %1272 = vmatprep.subr.mxu0 0.0
    %1273 = vmatpush1.msra.mxu0 0.0
    %1274 = vmatprep.subr.mxu0 0.0
    %1275 = vmatpush1.msra.mxu0 0.0
    %1276 = vmatprep.subr.mxu0 0.0
    %1277 = vmatpush1.msra.mxu0 0.0
    %1278 = vmatprep.subr.mxu0 0.0
    %1279 = vmatpush1.msra.mxu0 0.0
    %1280 = vmatprep.subr.mxu0 0.0
    %1281 = vmatpush1.msra.mxu0 0.0
    %1282 = vmatprep.subr.mxu0 0.0
    %1283 = vmatpush1.msra.mxu0 0.0
    %1284 = vmatprep.subr.mxu0 0.0
    %1285 = vmatpush1.msra.mxu0 0.0
    %1286 = vmatprep.subr.mxu0 0.0
    %1287 = vmatpush1.msra.mxu0 0.0
    %1288 = vmatprep.subr.mxu0 0.0
    %1289 = vmatpush1.msra.mxu0 0.0
    %1290 = vmatprep.mubr.f32.mxu0 0.0
    %1291 = vmatmul.mubr.f32.gmra.mrb[0].mxu0 %v1221
    %v1292 = vpop.f32.mrb[0].mxu0
    %v1293 = vadd.f32 %v1218, %v1292
    %v1294 = vpop.f32.mrb[0].mxu0
    %1295 = vmatprep.mubr.f32.mxu0 0.0
    %1296 = vmatmul.mubr.f32.gmra.mrb[0].mxu0 %v1224
    %v1297 = vpop.f32.mrb[0].mxu0
    %v1298 = vadd.f32 %v1218, %v1297
    %v1299 = vpop.f32.mrb[0].mxu0
    %1300 = vdwg.mxu0
    %1301 = vmatprep.subr.mxu0 0.0
    %1302 = vmatpush1.msra.mxu0 %v27
    %1303 = vmatprep.subr.mxu0 0.0
    %1304 = vmatpush1.msra.mxu0 %v28
    %1305 = vmatprep.subr.mxu0 0.0
    %1306 = vmatpush1.msra.mxu0 %v29
    %1307 = vmatprep.subr.mxu0 0.0
    %1308 = vmatpush1.msra.mxu0 %v30
    %1309 = vmatprep.subr.mxu0 0.0
    %1310 = vmatpush1.msra.mxu0 0.0
    %1311 = vmatprep.subr.mxu0 0.0
    %1312 = vmatpush1.msra.mxu0 0.0
    %1313 = vmatprep.subr.mxu0 0.0
    %1314 = vmatpush1.msra.mxu0 0.0
    %1315 = vmatprep.subr.mxu0 0.0
    %1316 = vmatpush1.msra.mxu0 0.0
    %1317 = vmatprep.subr.mxu0 0.0
    %1318 = vmatpush1.msra.mxu0 0.0
    %1319 = vmatprep.subr.mxu0 0.0
    %1320 = vmatpush1.msra.mxu0 0.0
    %1321 = vmatprep.subr.mxu0 0.0
    %1322 = vmatpush1.msra.mxu0 0.0
    %1323 = vmatprep.subr.mxu0 0.0
    %1324 = vmatpush1.msra.mxu0 0.0
    %1325 = vmatprep.subr.mxu0 0.0
    %1326 = vmatpush1.msra.mxu0 0.0
    %1327 = vmatprep.subr.mxu0 0.0
    %1328 = vmatpush1.msra.mxu0 0.0
    %1329 = vmatprep.subr.mxu0 0.0
    %1330 = vmatpush1.msra.mxu0 0.0
    %1331 = vmatprep.subr.mxu0 0.0
    %1332 = vmatpush1.msra.mxu0 0.0
    %1333 = vmatprep.subr.mxu0 0.0
    %1334 = vmatpush1.msra.mxu0 0.0
    %1335 = vmatprep.subr.mxu0 0.0
    %1336 = vmatpush1.msra.mxu0 0.0
    %1337 = vmatprep.subr.mxu0 0.0
    %1338 = vmatpush1.msra.mxu0 0.0
    %1339 = vmatprep.subr.mxu0 0.0
    %1340 = vmatpush1.msra.mxu0 0.0
    %1341 = vmatprep.subr.mxu0 0.0
    %1342 = vmatpush1.msra.mxu0 0.0
    %1343 = vmatprep.subr.mxu0 0.0
    %1344 = vmatpush1.msra.mxu0 0.0
    %1345 = vmatprep.subr.mxu0 0.0
    %1346 = vmatpush1.msra.mxu0 0.0
    %1347 = vmatprep.subr.mxu0 0.0
    %1348 = vmatpush1.msra.mxu0 0.0
    %1349 = vmatprep.subr.mxu0 0.0
    %1350 = vmatpush1.msra.mxu0 0.0
    %1351 = vmatprep.subr.mxu0 0.0
    %1352 = vmatpush1.msra.mxu0 0.0
    %1353 = vmatprep.subr.mxu0 0.0
    %1354 = vmatpush1.msra.mxu0 0.0
    %1355 = vmatprep.subr.mxu0 0.0
    %1356 = vmatpush1.msra.mxu0 0.0
    %1357 = vmatprep.subr.mxu0 0.0
    %1358 = vmatpush1.msra.mxu0 0.0
    %1359 = vmatprep.subr.mxu0 0.0
    %1360 = vmatpush1.msra.mxu0 0.0
    %1361 = vmatprep.subr.mxu0 0.0
    %1362 = vmatpush1.msra.mxu0 0.0
    %1363 = vmatprep.subr.mxu0 0.0
    %1364 = vmatpush1.msra.mxu0 0.0
    %1365 = vmatprep.mubr.f32.mxu0 0.0
    %1366 = vmatmul.mubr.f32.gmra.mrb[0].mxu0 %v1221
    %v1367 = vpop.f32.mrb[0].mxu0
    %v1368 = vadd.f32 0.0, %v1367
    %v1369 = vpop.f32.mrb[0].mxu0
    %1370 = vmatprep.mubr.f32.mxu0 0.0
    %1371 = vmatmul.mubr.f32.gmra.mrb[0].mxu0 %v1224
    %v1372 = vpop.f32.mrb[0].mxu0
    %v1373 = vadd.f32 0.0, %v1372
    %v1374 = vpop.f32.mrb[0].mxu0
    %1375 = vdwg.mxu0
    %v1377 = vsel %vm264, %v1197, 0
    %v1380 = vsel %vm264, %v1202, 0
    %v1383 = vsel %vm264, %v1293, 0
    %v1386 = vsel %vm264, %v1298, 0
    %1388 = vmatprep.subr.mxu0 0.0
    %1389 = vmatpush1.xpose.msra.mxu0 %v1383
    %1390 = vmatprep.subr.mxu0 0.0
    %1391 = vmatpush1.xpose.msra.mxu0 %v1386
    %1392 = vmatprep.subr.mxu0 0.0
    %1393 = vmatpush1.xpose.msra.mxu0 0.0
    %1394 = vmatprep.subr.mxu0 0.0
    %1395 = vmatpush1.xpose.msra.mxu0 0.0
    %1396 = vmatprep.subr.mxu0 0.0
    %1397 = vmatpush1.xpose.msra.mxu0 0.0
    %1398 = vmatprep.subr.mxu0 0.0
    %1399 = vmatpush1.xpose.msra.mxu0 0.0
    %1400 = vmatprep.subr.mxu0 0.0
    %1401 = vmatpush1.xpose.msra.mxu0 0.0
    %1402 = vmatprep.subr.mxu0 0.0
    %1403 = vmatpush1.xpose.msra.mxu0 0.0
    %1404 = vmatprep.subr.mxu0 0.0
    %1405 = vmatpush1.xpose.msra.mxu0 0.0
    %1406 = vmatprep.subr.mxu0 0.0
    %1407 = vmatpush1.xpose.msra.mxu0 0.0
    %1408 = vmatprep.subr.mxu0 0.0
    %1409 = vmatpush1.xpose.msra.mxu0 0.0
    %1410 = vmatprep.subr.mxu0 0.0
    %1411 = vmatpush1.xpose.msra.mxu0 0.0
    %1412 = vmatprep.subr.mxu0 0.0
    %1413 = vmatpush1.xpose.msra.mxu0 0.0
    %1414 = vmatprep.subr.mxu0 0.0
    %1415 = vmatpush1.xpose.msra.mxu0 0.0
    %1416 = vmatprep.subr.mxu0 0.0
    %1417 = vmatpush1.xpose.msra.mxu0 0.0
    %1418 = vmatprep.subr.mxu0 0.0
    %1419 = vmatpush1.xpose.msra.mxu0 0.0
    %1420 = vmatprep.subr.mxu0 0.0
    %1421 = vmatpush1.xpose.msra.mxu0 0.0
    %1422 = vmatprep.subr.mxu0 0.0
    %1423 = vmatpush1.xpose.msra.mxu0 0.0
    %1424 = vmatprep.subr.mxu0 0.0
    %1425 = vmatpush1.xpose.msra.mxu0 0.0
    %1426 = vmatprep.subr.mxu0 0.0
    %1427 = vmatpush1.xpose.msra.mxu0 0.0
    %1428 = vmatprep.subr.mxu0 0.0
    %1429 = vmatpush1.xpose.msra.mxu0 0.0
    %1430 = vmatprep.subr.mxu0 0.0
    %1431 = vmatpush1.xpose.msra.mxu0 0.0
    %1432 = vmatprep.subr.mxu0 0.0
    %1433 = vmatpush1.xpose.msra.mxu0 0.0
    %1434 = vmatprep.subr.mxu0 0.0
    %1435 = vmatpush1.xpose.msra.mxu0 0.0
    %1436 = vmatprep.subr.mxu0 0.0
    %1437 = vmatpush1.xpose.msra.mxu0 0.0
    %1438 = vmatprep.subr.mxu0 0.0
    %1439 = vmatpush1.xpose.msra.mxu0 0.0
    %1440 = vmatprep.subr.mxu0 0.0
    %1441 = vmatpush1.xpose.msra.mxu0 0.0
    %1442 = vmatprep.subr.mxu0 0.0
    %1443 = vmatpush1.xpose.msra.mxu0 0.0
    %1444 = vmatprep.subr.mxu0 0.0
    %1445 = vmatpush1.xpose.msra.mxu0 0.0
    %1446 = vmatprep.subr.mxu0 0.0
    %1447 = vmatpush1.xpose.msra.mxu0 0.0
    %1448 = vmatprep.subr.mxu0 0.0
    %1449 = vmatpush1.xpose.msra.mxu0 0.0
    %1450 = vmatprep.subr.mxu0 0.0
    %1451 = vmatpush1.xpose.msra.mxu0 0.0
    %1452 = vmatprep.mubr.f32.mxu0 0.0
    %1453 = vmatmul.mubr.f32.gmra.mrb[0].mxu0 %v1377
    %v1454 = vpop.f32.mrb[0].mxu0
    %v1455 = vadd.f32 %v56, %v1454
    %v1456 = vpop.f32.mrb[0].mxu0
    %1457 = vmatprep.mubr.f32.mxu0 0.0
    %1458 = vmatmul.mubr.f32.gmra.mrb[0].mxu0 %v1380
    %v1459 = vpop.f32.mrb[0].mxu0
    %v1460 = vadd.f32 %v57, %v1459
    %v1461 = vpop.f32.mrb[0].mxu0
    %1462 = vdwg.mxu0
    %v1463 = vsel %vm348, %v1455, -inf
    %1464 = vmax.xlane.f32.xlu0 %v1463
    %v1465 = vpop.xlane.xlu0 %1464
    %v1466 = vsel %vm348, %v1460, -inf
    %1467 = vmax.xlane.f32.xlu0 %v1466
    %v1468 = vpop.xlane.xlu0 %1467
    %v1469 = vsub.f32 %v1455, %v1465
    %v1470 = vsub.f32 %v1460, %v1468
    %v1471 = vmul.f32 %v1469, 1.442695
    %v1472 = vpow.pop %v1471
    %v1473 = vmul.f32 %v1470, 1.442695
    %v1474 = vpow.pop %v1473
    %v1475 = vsel %vm348, %v1472, 0.0
    %1476 = vadd.xlane.f32.xlu0 %v1475
    %v1477 = vpop.xlane.xlu0 %1476
    %v1478 = vsel %vm348, %v1474, 0.0
    %1479 = vadd.xlane.f32.xlu0 %v1478
    %v1480 = vpop.xlane.xlu0 %1479
    %v1481 = vrcp.pop %v1477
    %v1482 = vrcp.pop %v1480
    %v1483 = vmul.f32 %v1472, %v1481
    %v1484 = vmul.f32 %v1474, %v1482
    %v1486 = vsel %vm348, %v1483, 0
    %v1489 = vsel %vm348, %v1484, 0
    %1491 = vmatprep.subr.mxu0 0.0
    %1492 = vmatpush1.msra.mxu0 %v1368
    %1493 = vmatprep.subr.mxu0 0.0
    %1494 = vmatpush1.msra.mxu0 %v1373
    %1495 = vmatprep.subr.mxu0 0.0
    %1496 = vmatpush1.msra.mxu0 0.0
    %1497 = vmatprep.subr.mxu0 0.0
    %1498 = vmatpush1.msra.mxu0 0.0
    %1499 = vmatprep.subr.mxu0 0.0
    %1500 = vmatpush1.msra.mxu0 0.0
    %1501 = vmatprep.subr.mxu0 0.0
    %1502 = vmatpush1.msra.mxu0 0.0
    %1503 = vmatprep.subr.mxu0 0.0
    %1504 = vmatpush1.msra.mxu0 0.0
    %1505 = vmatprep.subr.mxu0 0.0
    %1506 = vmatpush1.msra.mxu0 0.0
    %1507 = vmatprep.subr.mxu0 0.0
    %1508 = vmatpush1.msra.mxu0 0.0
    %1509 = vmatprep.subr.mxu0 0.0
    %1510 = vmatpush1.msra.mxu0 0.0
    %1511 = vmatprep.subr.mxu0 0.0
    %1512 = vmatpush1.msra.mxu0 0.0
    %1513 = vmatprep.subr.mxu0 0.0
    %1514 = vmatpush1.msra.mxu0 0.0
    %1515 = vmatprep.subr.mxu0 0.0
    %1516 = vmatpush1.msra.mxu0 0.0
    %1517 = vmatprep.subr.mxu0 0.0
    %1518 = vmatpush1.msra.mxu0 0.0
    %1519 = vmatprep.subr.mxu0 0.0
    %1520 = vmatpush1.msra.mxu0 0.0
    %1521 = vmatprep.subr.mxu0 0.0
    %1522 = vmatpush1.msra.mxu0 0.0
    %1523 = vmatprep.subr.mxu0 0.0
    %1524 = vmatpush1.msra.mxu0 0.0
    %1525 = vmatprep.subr.mxu0 0.0
    %1526 = vmatpush1.msra.mxu0 0.0
    %1527 = vmatprep.subr.mxu0 0.0
    %1528 = vmatpush1.msra.mxu0 0.0
    %1529 = vmatprep.subr.mxu0 0.0
    %1530 = vmatpush1.msra.mxu0 0.0
    %1531 = vmatprep.subr.mxu0 0.0
    %1532 = vmatpush1.msra.mxu0 0.0
    %1533 = vmatprep.subr.mxu0 0.0
    %1534 = vmatpush1.msra.mxu0 0.0
    %1535 = vmatprep.subr.mxu0 0.0
    %1536 = vmatpush1.msra.mxu0 0.0
    %1537 = vmatprep.subr.mxu0 0.0
    %1538 = vmatpush1.msra.mxu0 0.0
    %1539 = vmatprep.subr.mxu0 0.0
    %1540 = vmatpush1.msra.mxu0 0.0
    %1541 = vmatprep.subr.mxu0 0.0
    %1542 = vmatpush1.msra.mxu0 0.0
    %1543 = vmatprep.subr.mxu0 0.0
    %1544 = vmatpush1.msra.mxu0 0.0
    %1545 = vmatprep.subr.mxu0 0.0
    %1546 = vmatpush1.msra.mxu0 0.0
    %1547 = vmatprep.subr.mxu0 0.0
    %1548 = vmatpush1.msra.mxu0 0.0
    %1549 = vmatprep.subr.mxu0 0.0
    %1550 = vmatpush1.msra.mxu0 0.0
    %1551 = vmatprep.subr.mxu0 0.0
    %1552 = vmatpush1.msra.mxu0 0.0
    %1553 = vmatprep.subr.mxu0 0.0
    %1554 = vmatpush1.msra.mxu0 0.0
    %1555 = vmatprep.mubr.f32.mxu0 0.0
    %1556 = vmatmul.mubr.f32.gmra.mrb[0].mxu0 %v1486
    %v1557 = vpop.f32.mrb[0].mxu0
    %v1558 = vadd.f32 0.0, %v1557
    %v1559 = vpop.f32.mrb[0].mxu0
    %1560 = vmatprep.mubr.f32.mxu0 0.0
    %1561 = vmatmul.mubr.f32.gmra.mrb[0].mxu0 %v1489
    %v1562 = vpop.f32.mrb[0].mxu0
    %v1563 = vadd.f32 0.0, %v1562
    %v1564 = vpop.f32.mrb[0].mxu0
    %1565 = vdwg.mxu0
    %1568 = vrot.lane.b32.xlu0 %v1558, 32
    %v1569 = vpop.permute.xlu0 %1568
    %1570 = vrot.lane.b32.xlu0 %v1563, 32
    %v1571 = vpop.permute.xlu0 %1570
    %v1574 = vadd.f32 %v455, %v1569
    %v1575 = vadd.f32 %v455, %v1571
    %1576 = vrot.lane.b32.xlu0 %v1197, 120
    %v1577 = vpop.permute.xlu0 %1576
    %1578 = vrot.lane.b32.xlu0 %v1202, 120
    %v1579 = vpop.permute.xlu0 %1578
    %1580 = vrot.lane.b32.xlu0 %v1293, 120
    %v1581 = vpop.permute.xlu0 %1580
    %1582 = vrot.lane.b32.xlu0 %v1298, 120
    %v1583 = vpop.permute.xlu0 %1582
    %v1584 = vsel %vm264, %v1577, 0
    %v1586 = vsel %vm264, %v1579, 0
    %v1588 = vsel %vm264, %v1581, 0
    %v1590 = vsel %vm264, %v1583, 0
    %1592 = vmatprep.subr.mxu0 0.0
    %1593 = vmatpush1.xpose.msra.mxu0 %v1588
    %1594 = vmatprep.subr.mxu0 0.0
    %1595 = vmatpush1.xpose.msra.mxu0 %v1590
    %1596 = vmatprep.subr.mxu0 0.0
    %1597 = vmatpush1.xpose.msra.mxu0 0.0
    %1598 = vmatprep.subr.mxu0 0.0
    %1599 = vmatpush1.xpose.msra.mxu0 0.0
    %1600 = vmatprep.subr.mxu0 0.0
    %1601 = vmatpush1.xpose.msra.mxu0 0.0
    %1602 = vmatprep.subr.mxu0 0.0
    %1603 = vmatpush1.xpose.msra.mxu0 0.0
    %1604 = vmatprep.subr.mxu0 0.0
    %1605 = vmatpush1.xpose.msra.mxu0 0.0
    %1606 = vmatprep.subr.mxu0 0.0
    %1607 = vmatpush1.xpose.msra.mxu0 0.0
    %1608 = vmatprep.subr.mxu0 0.0
    %1609 = vmatpush1.xpose.msra.mxu0 0.0
    %1610 = vmatprep.subr.mxu0 0.0
    %1611 = vmatpush1.xpose.msra.mxu0 0.0
    %1612 = vmatprep.subr.mxu0 0.0
    %1613 = vmatpush1.xpose.msra.mxu0 0.0
    %1614 = vmatprep.subr.mxu0 0.0
    %1615 = vmatpush1.xpose.msra.mxu0 0.0
    %1616 = vmatprep.subr.mxu0 0.0
    %1617 = vmatpush1.xpose.msra.mxu0 0.0
    %1618 = vmatprep.subr.mxu0 0.0
    %1619 = vmatpush1.xpose.msra.mxu0 0.0
    %1620 = vmatprep.subr.mxu0 0.0
    %1621 = vmatpush1.xpose.msra.mxu0 0.0
    %1622 = vmatprep.subr.mxu0 0.0
    %1623 = vmatpush1.xpose.msra.mxu0 0.0
    %1624 = vmatprep.subr.mxu0 0.0
    %1625 = vmatpush1.xpose.msra.mxu0 0.0
    %1626 = vmatprep.subr.mxu0 0.0
    %1627 = vmatpush1.xpose.msra.mxu0 0.0
    %1628 = vmatprep.subr.mxu0 0.0
    %1629 = vmatpush1.xpose.msra.mxu0 0.0
    %1630 = vmatprep.subr.mxu0 0.0
    %1631 = vmatpush1.xpose.msra.mxu0 0.0
    %1632 = vmatprep.subr.mxu0 0.0
    %1633 = vmatpush1.xpose.msra.mxu0 0.0
    %1634 = vmatprep.subr.mxu0 0.0
    %1635 = vmatpush1.xpose.msra.mxu0 0.0
    %1636 = vmatprep.subr.mxu0 0.0
    %1637 = vmatpush1.xpose.msra.mxu0 0.0
    %1638 = vmatprep.subr.mxu0 0.0
    %1639 = vmatpush1.xpose.msra.mxu0 0.0
    %1640 = vmatprep.subr.mxu0 0.0
    %1641 = vmatpush1.xpose.msra.mxu0 0.0
    %1642 = vmatprep.subr.mxu0 0.0
    %1643 = vmatpush1.xpose.msra.mxu0 0.0
    %1644 = vmatprep.subr.mxu0 0.0
    %1645 = vmatpush1.xpose.msra.mxu0 0.0
    %1646 = vmatprep.subr.mxu0 0.0
    %1647 = vmatpush1.xpose.msra.mxu0 0.0
    %1648 = vmatprep.subr.mxu0 0.0
    %1649 = vmatpush1.xpose.msra.mxu0 0.0
    %1650 = vmatprep.subr.mxu0 0.0
    %1651 = vmatpush1.xpose.msra.mxu0 0.0
    %1652 = vmatprep.subr.mxu0 0.0
    %1653 = vmatpush1.xpose.msra.mxu0 0.0
    %1654 = vmatprep.subr.mxu0 0.0
    %1655 = vmatpush1.xpose.msra.mxu0 0.0
    %1656 = vmatprep.mubr.f32.mxu0 0.0
    %1657 = vmatmul.mubr.f32.gmra.mrb[0].mxu0 %v1584
    %v1658 = vpop.f32.mrb[0].mxu0
    %v1659 = vadd.f32 %v56, %v1658
    %v1660 = vpop.f32.mrb[0].mxu0
    %1661 = vmatprep.mubr.f32.mxu0 0.0
    %1662 = vmatmul.mubr.f32.gmra.mrb[0].mxu0 %v1586
    %v1663 = vpop.f32.mrb[0].mxu0
    %v1664 = vadd.f32 %v57, %v1663
    %v1665 = vpop.f32.mrb[0].mxu0
    %1666 = vdwg.mxu0
    %v1667 = vsel %vm348, %v1659, -inf
    %1668 = vmax.xlane.f32.xlu0 %v1667
    %v1669 = vpop.xlane.xlu0 %1668
    %v1670 = vsel %vm348, %v1664, -inf
    %1671 = vmax.xlane.f32.xlu0 %v1670
    %v1672 = vpop.xlane.xlu0 %1671
    %v1673 = vsub.f32 %v1659, %v1669
    %v1674 = vsub.f32 %v1664, %v1672
    %v1675 = vmul.f32 %v1673, 1.442695
    %v1676 = vpow.pop %v1675
    %v1677 = vmul.f32 %v1674, 1.442695
    %v1678 = vpow.pop %v1677
    %v1679 = vsel %vm348, %v1676, 0.0
    %1680 = vadd.xlane.f32.xlu0 %v1679
    %v1681 = vpop.xlane.xlu0 %1680
    %v1682 = vsel %vm348, %v1678, 0.0
    %1683 = vadd.xlane.f32.xlu0 %v1682
    %v1684 = vpop.xlane.xlu0 %1683
    %v1685 = vrcp.pop %v1681
    %v1686 = vrcp.pop %v1684
    %v1687 = vmul.f32 %v1676, %v1685
    %v1688 = vmul.f32 %v1678, %v1686
    %1691 = vrot.lane.b32.xlu0 %v1368, 96
    %v1692 = vpop.permute.xlu0 %1691
    %1693 = vrot.lane.b32.xlu0 %v1373, 96
    %v1694 = vpop.permute.xlu0 %1693
    %v1698 = vsel %vm348, %v1687, 0
    %v1701 = vsel %vm348, %v1688, 0
    %1703 = vmatprep.subr.mxu0 0.0
    %1704 = vmatpush1.msra.mxu0 %v1692
    %1705 = vmatprep.subr.mxu0 0.0
    %1706 = vmatpush1.msra.mxu0 %v1694
    %1707 = vmatprep.subr.mxu0 0.0
    %1708 = vmatpush1.msra.mxu0 0.0
    %1709 = vmatprep.subr.mxu0 0.0
    %1710 = vmatpush1.msra.mxu0 0.0
    %1711 = vmatprep.subr.mxu0 0.0
    %1712 = vmatpush1.msra.mxu0 0.0
    %1713 = vmatprep.subr.mxu0 0.0
    %1714 = vmatpush1.msra.mxu0 0.0
    %1715 = vmatprep.subr.mxu0 0.0
    %1716 = vmatpush1.msra.mxu0 0.0
    %1717 = vmatprep.subr.mxu0 0.0
    %1718 = vmatpush1.msra.mxu0 0.0
    %1719 = vmatprep.subr.mxu0 0.0
    %1720 = vmatpush1.msra.mxu0 0.0
    %1721 = vmatprep.subr.mxu0 0.0
    %1722 = vmatpush1.msra.mxu0 0.0
    %1723 = vmatprep.subr.mxu0 0.0
    %1724 = vmatpush1.msra.mxu0 0.0
    %1725 = vmatprep.subr.mxu0 0.0
    %1726 = vmatpush1.msra.mxu0 0.0
    %1727 = vmatprep.subr.mxu0 0.0
    %1728 = vmatpush1.msra.mxu0 0.0
    %1729 = vmatprep.subr.mxu0 0.0
    %1730 = vmatpush1.msra.mxu0 0.0
    %1731 = vmatprep.subr.mxu0 0.0
    %1732 = vmatpush1.msra.mxu0 0.0
    %1733 = vmatprep.subr.mxu0 0.0
    %1734 = vmatpush1.msra.mxu0 0.0
    %1735 = vmatprep.subr.mxu0 0.0
    %1736 = vmatpush1.msra.mxu0 0.0
    %1737 = vmatprep.subr.mxu0 0.0
    %1738 = vmatpush1.msra.mxu0 0.0
    %1739 = vmatprep.subr.mxu0 0.0
    %1740 = vmatpush1.msra.mxu0 0.0
    %1741 = vmatprep.subr.mxu0 0.0
    %1742 = vmatpush1.msra.mxu0 0.0
    %1743 = vmatprep.subr.mxu0 0.0
    %1744 = vmatpush1.msra.mxu0 0.0
    %1745 = vmatprep.subr.mxu0 0.0
    %1746 = vmatpush1.msra.mxu0 0.0
    %1747 = vmatprep.subr.mxu0 0.0
    %1748 = vmatpush1.msra.mxu0 0.0
    %1749 = vmatprep.subr.mxu0 0.0
    %1750 = vmatpush1.msra.mxu0 0.0
    %1751 = vmatprep.subr.mxu0 0.0
    %1752 = vmatpush1.msra.mxu0 0.0
    %1753 = vmatprep.subr.mxu0 0.0
    %1754 = vmatpush1.msra.mxu0 0.0
    %1755 = vmatprep.subr.mxu0 0.0
    %1756 = vmatpush1.msra.mxu0 0.0
    %1757 = vmatprep.subr.mxu0 0.0
    %1758 = vmatpush1.msra.mxu0 0.0
    %1759 = vmatprep.subr.mxu0 0.0
    %1760 = vmatpush1.msra.mxu0 0.0
    %1761 = vmatprep.subr.mxu0 0.0
    %1762 = vmatpush1.msra.mxu0 0.0
    %1763 = vmatprep.subr.mxu0 0.0
    %1764 = vmatpush1.msra.mxu0 0.0
    %1765 = vmatprep.subr.mxu0 0.0
    %1766 = vmatpush1.msra.mxu0 0.0
    %1767 = vmatprep.mubr.f32.mxu0 0.0
    %1768 = vmatmul.mubr.f32.gmra.mrb[0].mxu0 %v1698
    %v1769 = vpop.f32.mrb[0].mxu0
    %v1770 = vadd.f32 0.0, %v1769
    %v1771 = vpop.f32.mrb[0].mxu0
    %1772 = vmatprep.mubr.f32.mxu0 0.0
    %1773 = vmatmul.mubr.f32.gmra.mrb[0].mxu0 %v1701
    %v1774 = vpop.f32.mrb[0].mxu0
    %v1775 = vadd.f32 0.0, %v1774
    %v1776 = vpop.f32.mrb[0].mxu0
    %1777 = vdwg.mxu0
    %1780 = vrot.lane.b32.xlu0 %v1770, 32
    %v1781 = vpop.permute.xlu0 %1780
    %1782 = vrot.lane.b32.xlu0 %v1775, 32
    %v1783 = vpop.permute.xlu0 %1782
    %v1786 = vadd.f32 %v1574, %v1781
    %v1787 = vadd.f32 %v1575, %v1783
    %1788 = vrot.lane.b32.xlu0 %v1197, 112
    %v1789 = vpop.permute.xlu0 %1788
    %1790 = vrot.lane.b32.xlu0 %v1202, 112
    %v1791 = vpop.permute.xlu0 %1790
    %1792 = vrot.lane.b32.xlu0 %v1293, 112
    %v1793 = vpop.permute.xlu0 %1792
    %1794 = vrot.lane.b32.xlu0 %v1298, 112
    %v1795 = vpop.permute.xlu0 %1794
    %v1796 = vsel %vm264, %v1789, 0
    %v1798 = vsel %vm264, %v1791, 0
    %v1800 = vsel %vm264, %v1793, 0
    %v1802 = vsel %vm264, %v1795, 0
    %1804 = vmatprep.subr.mxu0 0.0
    %1805 = vmatpush1.xpose.msra.mxu0 %v1800
    %1806 = vmatprep.subr.mxu0 0.0
    %1807 = vmatpush1.xpose.msra.mxu0 %v1802
    %1808 = vmatprep.subr.mxu0 0.0
    %1809 = vmatpush1.xpose.msra.mxu0 0.0
    %1810 = vmatprep.subr.mxu0 0.0
    %1811 = vmatpush1.xpose.msra.mxu0 0.0
    %1812 = vmatprep.subr.mxu0 0.0
    %1813 = vmatpush1.xpose.msra.mxu0 0.0
    %1814 = vmatprep.subr.mxu0 0.0
    %1815 = vmatpush1.xpose.msra.mxu0 0.0
    %1816 = vmatprep.subr.mxu0 0.0
    %1817 = vmatpush1.xpose.msra.mxu0 0.0
    %1818 = vmatprep.subr.mxu0 0.0
    %1819 = vmatpush1.xpose.msra.mxu0 0.0
    %1820 = vmatprep.subr.mxu0 0.0
    %1821 = vmatpush1.xpose.msra.mxu0 0.0
    %1822 = vmatprep.subr.mxu0 0.0
    %1823 = vmatpush1.xpose.msra.mxu0 0.0
    %1824 = vmatprep.subr.mxu0 0.0
    %1825 = vmatpush1.xpose.msra.mxu0 0.0
    %1826 = vmatprep.subr.mxu0 0.0
    %1827 = vmatpush1.xpose.msra.mxu0 0.0
    %1828 = vmatprep.subr.mxu0 0.0
    %1829 = vmatpush1.xpose.msra.mxu0 0.0
    %1830 = vmatprep.subr.mxu0 0.0
    %1831 = vmatpush1.xpose.msra.mxu0 0.0
    %1832 = vmatprep.subr.mxu0 0.0
    %1833 = vmatpush1.xpose.msra.mxu0 0.0
    %1834 = vmatprep.subr.mxu0 0.0
    %1835 = vmatpush1.xpose.msra.mxu0 0.0
    %1836 = vmatprep.subr.mxu0 0.0
    %1837 = vmatpush1.xpose.msra.mxu0 0.0
    %1838 = vmatprep.subr.mxu0 0.0
    %1839 = vmatpush1.xpose.msra.mxu0 0.0
    %1840 = vmatprep.subr.mxu0 0.0
    %1841 = vmatpush1.xpose.msra.mxu0 0.0
    %1842 = vmatprep.subr.mxu0 0.0
    %1843 = vmatpush1.xpose.msra.mxu0 0.0
    %1844 = vmatprep.subr.mxu0 0.0
    %1845 = vmatpush1.xpose.msra.mxu0 0.0
    %1846 = vmatprep.subr.mxu0 0.0
    %1847 = vmatpush1.xpose.msra.mxu0 0.0
    %1848 = vmatprep.subr.mxu0 0.0
    %1849 = vmatpush1.xpose.msra.mxu0 0.0
    %1850 = vmatprep.subr.mxu0 0.0
    %1851 = vmatpush1.xpose.msra.mxu0 0.0
    %1852 = vmatprep.subr.mxu0 0.0
    %1853 = vmatpush1.xpose.msra.mxu0 0.0
    %1854 = vmatprep.subr.mxu0 0.0
    %1855 = vmatpush1.xpose.msra.mxu0 0.0
    %1856 = vmatprep.subr.mxu0 0.0
    %1857 = vmatpush1.xpose.msra.mxu0 0.0
    %1858 = vmatprep.subr.mxu0 0.0
    %1859 = vmatpush1.xpose.msra.mxu0 0.0
    %1860 = vmatprep.subr.mxu0 0.0
    %1861 = vmatpush1.xpose.msra.mxu0 0.0
    %1862 = vmatprep.subr.mxu0 0.0
    %1863 = vmatpush1.xpose.msra.mxu0 0.0
    %1864 = vmatprep.subr.mxu0 0.0
    %1865 = vmatpush1.xpose.msra.mxu0 0.0
    %1866 = vmatprep.subr.mxu0 0.0
    %1867 = vmatpush1.xpose.msra.mxu0 0.0
    %1868 = vmatprep.mubr.f32.mxu0 0.0
    %1869 = vmatmul.mubr.f32.gmra.mrb[0].mxu0 %v1796
    %v1870 = vpop.f32.mrb[0].mxu0
    %v1871 = vadd.f32 %v56, %v1870
    %v1872 = vpop.f32.mrb[0].mxu0
    %1873 = vmatprep.mubr.f32.mxu0 0.0
    %1874 = vmatmul.mubr.f32.gmra.mrb[0].mxu0 %v1798
    %v1875 = vpop.f32.mrb[0].mxu0
    %v1876 = vadd.f32 %v57, %v1875
    %v1877 = vpop.f32.mrb[0].mxu0
    %1878 = vdwg.mxu0
    %v1879 = vsel %vm348, %v1871, -inf
    %1880 = vmax.xlane.f32.xlu0 %v1879
    %v1881 = vpop.xlane.xlu0 %1880
    %v1882 = vsel %vm348, %v1876, -inf
    %1883 = vmax.xlane.f32.xlu0 %v1882
    %v1884 = vpop.xlane.xlu0 %1883
    %v1885 = vsub.f32 %v1871, %v1881
    %v1886 = vsub.f32 %v1876, %v1884
    %v1887 = vmul.f32 %v1885, 1.442695
    %v1888 = vpow.pop %v1887
    %v1889 = vmul.f32 %v1886, 1.442695
    %v1890 = vpow.pop %v1889
    %v1891 = vsel %vm348, %v1888, 0.0
    %1892 = vadd.xlane.f32.xlu0 %v1891
    %v1893 = vpop.xlane.xlu0 %1892
    %v1894 = vsel %vm348, %v1890, 0.0
    %1895 = vadd.xlane.f32.xlu0 %v1894
    %v1896 = vpop.xlane.xlu0 %1895
    %v1897 = vrcp.pop %v1893
    %v1898 = vrcp.pop %v1896
    %v1899 = vmul.f32 %v1888, %v1897
    %v1900 = vmul.f32 %v1890, %v1898
    %1901 = vrot.lane.b32.xlu0 %v1368, 64
    %v1902 = vpop.permute.xlu0 %1901
    %1903 = vrot.lane.b32.xlu0 %v1373, 64
    %v1904 = vpop.permute.xlu0 %1903
    %v1908 = vsel %vm348, %v1899, 0
    %v1911 = vsel %vm348, %v1900, 0
    %1913 = vmatprep.subr.mxu0 0.0
    %1914 = vmatpush1.msra.mxu0 %v1902
    %1915 = vmatprep.subr.mxu0 0.0
    %1916 = vmatpush1.msra.mxu0 %v1904
    %1917 = vmatprep.subr.mxu0 0.0
    %1918 = vmatpush1.msra.mxu0 0.0
    %1919 = vmatprep.subr.mxu0 0.0
    %1920 = vmatpush1.msra.mxu0 0.0
    %1921 = vmatprep.subr.mxu0 0.0
    %1922 = vmatpush1.msra.mxu0 0.0
    %1923 = vmatprep.subr.mxu0 0.0
    %1924 = vmatpush1.msra.mxu0 0.0
    %1925 = vmatprep.subr.mxu0 0.0
    %1926 = vmatpush1.msra.mxu0 0.0
    %1927 = vmatprep.subr.mxu0 0.0
    %1928 = vmatpush1.msra.mxu0 0.0
    %1929 = vmatprep.subr.mxu0 0.0
    %1930 = vmatpush1.msra.mxu0 0.0
    %1931 = vmatprep.subr.mxu0 0.0
    %1932 = vmatpush1.msra.mxu0 0.0
    %1933 = vmatprep.subr.mxu0 0.0
    %1934 = vmatpush1.msra.mxu0 0.0
    %1935 = vmatprep.subr.mxu0 0.0
    %1936 = vmatpush1.msra.mxu0 0.0
    %1937 = vmatprep.subr.mxu0 0.0
    %1938 = vmatpush1.msra.mxu0 0.0
    %1939 = vmatprep.subr.mxu0 0.0
    %1940 = vmatpush1.msra.mxu0 0.0
    %1941 = vmatprep.subr.mxu0 0.0
    %1942 = vmatpush1.msra.mxu0 0.0
    %1943 = vmatprep.subr.mxu0 0.0
    %1944 = vmatpush1.msra.mxu0 0.0
    %1945 = vmatprep.subr.mxu0 0.0
    %1946 = vmatpush1.msra.mxu0 0.0
    %1947 = vmatprep.subr.mxu0 0.0
    %1948 = vmatpush1.msra.mxu0 0.0
    %1949 = vmatprep.subr.mxu0 0.0
    %1950 = vmatpush1.msra.mxu0 0.0
    %1951 = vmatprep.subr.mxu0 0.0
    %1952 = vmatpush1.msra.mxu0 0.0
    %1953 = vmatprep.subr.mxu0 0.0
    %1954 = vmatpush1.msra.mxu0 0.0
    %1955 = vmatprep.subr.mxu0 0.0
    %1956 = vmatpush1.msra.mxu0 0.0
    %1957 = vmatprep.subr.mxu0 0.0
    %1958 = vmatpush1.msra.mxu0 0.0
    %1959 = vmatprep.subr.mxu0 0.0
    %1960 = vmatpush1.msra.mxu0 0.0
    %1961 = vmatprep.subr.mxu0 0.0
    %1962 = vmatpush1.msra.mxu0 0.0
    %1963 = vmatprep.subr.mxu0 0.0
    %1964 = vmatpush1.msra.mxu0 0.0
    %1965 = vmatprep.subr.mxu0 0.0
    %1966 = vmatpush1.msra.mxu0 0.0
    %1967 = vmatprep.subr.mxu0 0.0
    %1968 = vmatpush1.msra.mxu0 0.0
    %1969 = vmatprep.subr.mxu0 0.0
    %1970 = vmatpush1.msra.mxu0 0.0
    %1971 = vmatprep.subr.mxu0 0.0
    %1972 = vmatpush1.msra.mxu0 0.0
    %1973 = vmatprep.subr.mxu0 0.0
    %1974 = vmatpush1.msra.mxu0 0.0
    %1975 = vmatprep.subr.mxu0 0.0
    %1976 = vmatpush1.msra.mxu0 0.0
    %1977 = vmatprep.mubr.f32.mxu0 0.0
    %1978 = vmatmul.mubr.f32.gmra.mrb[0].mxu0 %v1908
    %v1979 = vpop.f32.mrb[0].mxu0
    %v1980 = vadd.f32 0.0, %v1979
    %v1981 = vpop.f32.mrb[0].mxu0
    %1982 = vmatprep.mubr.f32.mxu0 0.0
    %1983 = vmatmul.mubr.f32.gmra.mrb[0].mxu0 %v1911
    %v1984 = vpop.f32.mrb[0].mxu0
    %v1985 = vadd.f32 0.0, %v1984
    %v1986 = vpop.f32.mrb[0].mxu0
    %1987 = vdwg.mxu0
    %1990 = vrot.lane.b32.xlu0 %v1980, 32
    %v1991 = vpop.permute.xlu0 %1990
    %1992 = vrot.lane.b32.xlu0 %v1985, 32
    %v1993 = vpop.permute.xlu0 %1992
    %v1996 = vadd.f32 %v1786, %v1991
    %v1997 = vadd.f32 %v1787, %v1993
    %1998 = vrot.lane.b32.xlu0 %v1197, 104
    %v1999 = vpop.permute.xlu0 %1998
    %2000 = vrot.lane.b32.xlu0 %v1202, 104
    %v2001 = vpop.permute.xlu0 %2000
    %2002 = vrot.lane.b32.xlu0 %v1293, 104
    %v2003 = vpop.permute.xlu0 %2002
    %2004 = vrot.lane.b32.xlu0 %v1298, 104
    %v2005 = vpop.permute.xlu0 %2004
    %v2006 = vsel %vm264, %v1999, 0
    %v2008 = vsel %vm264, %v2001, 0
    %v2010 = vsel %vm264, %v2003, 0
    %v2012 = vsel %vm264, %v2005, 0
    %2014 = vmatprep.subr.mxu0 0.0
    %2015 = vmatpush1.xpose.msra.mxu0 %v2010
    %2016 = vmatprep.subr.mxu0 0.0
    %2017 = vmatpush1.xpose.msra.mxu0 %v2012
    %2018 = vmatprep.subr.mxu0 0.0
    %2019 = vmatpush1.xpose.msra.mxu0 0.0
    %2020 = vmatprep.subr.mxu0 0.0
    %2021 = vmatpush1.xpose.msra.mxu0 0.0
    %2022 = vmatprep.subr.mxu0 0.0
    %2023 = vmatpush1.xpose.msra.mxu0 0.0
    %2024 = vmatprep.subr.mxu0 0.0
    %2025 = vmatpush1.xpose.msra.mxu0 0.0
    %2026 = vmatprep.subr.mxu0 0.0
    %2027 = vmatpush1.xpose.msra.mxu0 0.0
    %2028 = vmatprep.subr.mxu0 0.0
    %2029 = vmatpush1.xpose.msra.mxu0 0.0
    %2030 = vmatprep.subr.mxu0 0.0
    %2031 = vmatpush1.xpose.msra.mxu0 0.0
    %2032 = vmatprep.subr.mxu0 0.0
    %2033 = vmatpush1.xpose.msra.mxu0 0.0
    %2034 = vmatprep.subr.mxu0 0.0
    %2035 = vmatpush1.xpose.msra.mxu0 0.0
    %2036 = vmatprep.subr.mxu0 0.0
    %2037 = vmatpush1.xpose.msra.mxu0 0.0
    %2038 = vmatprep.subr.mxu0 0.0
    %2039 = vmatpush1.xpose.msra.mxu0 0.0
    %2040 = vmatprep.subr.mxu0 0.0
    %2041 = vmatpush1.xpose.msra.mxu0 0.0
    %2042 = vmatprep.subr.mxu0 0.0
    %2043 = vmatpush1.xpose.msra.mxu0 0.0
    %2044 = vmatprep.subr.mxu0 0.0
    %2045 = vmatpush1.xpose.msra.mxu0 0.0
    %2046 = vmatprep.subr.mxu0 0.0
    %2047 = vmatpush1.xpose.msra.mxu0 0.0
    %2048 = vmatprep.subr.mxu0 0.0
    %2049 = vmatpush1.xpose.msra.mxu0 0.0
    %2050 = vmatprep.subr.mxu0 0.0
    %2051 = vmatpush1.xpose.msra.mxu0 0.0
    %2052 = vmatprep.subr.mxu0 0.0
    %2053 = vmatpush1.xpose.msra.mxu0 0.0
    %2054 = vmatprep.subr.mxu0 0.0
    %2055 = vmatpush1.xpose.msra.mxu0 0.0
    %2056 = vmatprep.subr.mxu0 0.0
    %2057 = vmatpush1.xpose.msra.mxu0 0.0
    %2058 = vmatprep.subr.mxu0 0.0
    %2059 = vmatpush1.xpose.msra.mxu0 0.0
    %2060 = vmatprep.subr.mxu0 0.0
    %2061 = vmatpush1.xpose.msra.mxu0 0.0
    %2062 = vmatprep.subr.mxu0 0.0
    %2063 = vmatpush1.xpose.msra.mxu0 0.0
    %2064 = vmatprep.subr.mxu0 0.0
    %2065 = vmatpush1.xpose.msra.mxu0 0.0
    %2066 = vmatprep.subr.mxu0 0.0
    %2067 = vmatpush1.xpose.msra.mxu0 0.0
    %2068 = vmatprep.subr.mxu0 0.0
    %2069 = vmatpush1.xpose.msra.mxu0 0.0
    %2070 = vmatprep.subr.mxu0 0.0
    %2071 = vmatpush1.xpose.msra.mxu0 0.0
    %2072 = vmatprep.subr.mxu0 0.0
    %2073 = vmatpush1.xpose.msra.mxu0 0.0
    %2074 = vmatprep.subr.mxu0 0.0
    %2075 = vmatpush1.xpose.msra.mxu0 0.0
    %2076 = vmatprep.subr.mxu0 0.0
    %2077 = vmatpush1.xpose.msra.mxu0 0.0
    %2078 = vmatprep.mubr.f32.mxu0 0.0
    %2079 = vmatmul.mubr.f32.gmra.mrb[0].mxu0 %v2006
    %v2080 = vpop.f32.mrb[0].mxu0
    %v2081 = vadd.f32 %v56, %v2080
    %v2082 = vpop.f32.mrb[0].mxu0
    %2083 = vmatprep.mubr.f32.mxu0 0.0
    %2084 = vmatmul.mubr.f32.gmra.mrb[0].mxu0 %v2008
    %v2085 = vpop.f32.mrb[0].mxu0
    %v2086 = vadd.f32 %v57, %v2085
    %v2087 = vpop.f32.mrb[0].mxu0
    %2088 = vdwg.mxu0
    %v2089 = vsel %vm348, %v2081, -inf
    %2090 = vmax.xlane.f32.xlu0 %v2089
    %v2091 = vpop.xlane.xlu0 %2090
    %v2092 = vsel %vm348, %v2086, -inf
    %2093 = vmax.xlane.f32.xlu0 %v2092
    %v2094 = vpop.xlane.xlu0 %2093
    %v2095 = vsub.f32 %v2081, %v2091
    %v2096 = vsub.f32 %v2086, %v2094
    %v2097 = vmul.f32 %v2095, 1.442695
    %v2098 = vpow.pop %v2097
    %v2099 = vmul.f32 %v2096, 1.442695
    %v2100 = vpow.pop %v2099
    %v2101 = vsel %vm348, %v2098, 0.0
    %2102 = vadd.xlane.f32.xlu0 %v2101
    %v2103 = vpop.xlane.xlu0 %2102
    %v2104 = vsel %vm348, %v2100, 0.0
    %2105 = vadd.xlane.f32.xlu0 %v2104
    %v2106 = vpop.xlane.xlu0 %2105
    %v2107 = vrcp.pop %v2103
    %v2108 = vrcp.pop %v2106
    %v2109 = vmul.f32 %v2098, %v2107
    %v2110 = vmul.f32 %v2100, %v2108
    %2111 = vrot.lane.b32.xlu0 %v1368, 32
    %v2112 = vpop.permute.xlu0 %2111
    %2113 = vrot.lane.b32.xlu0 %v1373, 32
    %v2114 = vpop.permute.xlu0 %2113
    %v2118 = vsel %vm348, %v2109, 0
    %v2121 = vsel %vm348, %v2110, 0
    %2123 = vmatprep.subr.mxu0 0.0
    %2124 = vmatpush1.msra.mxu0 %v2112
    %2125 = vmatprep.subr.mxu0 0.0
    %2126 = vmatpush1.msra.mxu0 %v2114
    %2127 = vmatprep.subr.mxu0 0.0
    %2128 = vmatpush1.msra.mxu0 0.0
    %2129 = vmatprep.subr.mxu0 0.0
    %2130 = vmatpush1.msra.mxu0 0.0
    %2131 = vmatprep.subr.mxu0 0.0
    %2132 = vmatpush1.msra.mxu0 0.0
    %2133 = vmatprep.subr.mxu0 0.0
    %2134 = vmatpush1.msra.mxu0 0.0
    %2135 = vmatprep.subr.mxu0 0.0
    %2136 = vmatpush1.msra.mxu0 0.0
    %2137 = vmatprep.subr.mxu0 0.0
    %2138 = vmatpush1.msra.mxu0 0.0
    %2139 = vmatprep.subr.mxu0 0.0
    %2140 = vmatpush1.msra.mxu0 0.0
    %2141 = vmatprep.subr.mxu0 0.0
    %2142 = vmatpush1.msra.mxu0 0.0
    %2143 = vmatprep.subr.mxu0 0.0
    %2144 = vmatpush1.msra.mxu0 0.0
    %2145 = vmatprep.subr.mxu0 0.0
    %2146 = vmatpush1.msra.mxu0 0.0
    %2147 = vmatprep.subr.mxu0 0.0
    %2148 = vmatpush1.msra.mxu0 0.0
    %2149 = vmatprep.subr.mxu0 0.0
    %2150 = vmatpush1.msra.mxu0 0.0
    %2151 = vmatprep.subr.mxu0 0.0
    %2152 = vmatpush1.msra.mxu0 0.0
    %2153 = vmatprep.subr.mxu0 0.0
    %2154 = vmatpush1.msra.mxu0 0.0
    %2155 = vmatprep.subr.mxu0 0.0
    %2156 = vmatpush1.msra.mxu0 0.0
    %2157 = vmatprep.subr.mxu0 0.0
    %2158 = vmatpush1.msra.mxu0 0.0
    %2159 = vmatprep.subr.mxu0 0.0
    %2160 = vmatpush1.msra.mxu0 0.0
    %2161 = vmatprep.subr.mxu0 0.0
    %2162 = vmatpush1.msra.mxu0 0.0
    %2163 = vmatprep.subr.mxu0 0.0
    %2164 = vmatpush1.msra.mxu0 0.0
    %2165 = vmatprep.subr.mxu0 0.0
    %2166 = vmatpush1.msra.mxu0 0.0
    %2167 = vmatprep.subr.mxu0 0.0
    %2168 = vmatpush1.msra.mxu0 0.0
    %2169 = vmatprep.subr.mxu0 0.0
    %2170 = vmatpush1.msra.mxu0 0.0
    %2171 = vmatprep.subr.mxu0 0.0
    %2172 = vmatpush1.msra.mxu0 0.0
    %2173 = vmatprep.subr.mxu0 0.0
    %2174 = vmatpush1.msra.mxu0 0.0
    %2175 = vmatprep.subr.mxu0 0.0
    %2176 = vmatpush1.msra.mxu0 0.0
    %2177 = vmatprep.subr.mxu0 0.0
    %2178 = vmatpush1.msra.mxu0 0.0
    %2179 = vmatprep.subr.mxu0 0.0
    %2180 = vmatpush1.msra.mxu0 0.0
    %2181 = vmatprep.subr.mxu0 0.0
    %2182 = vmatpush1.msra.mxu0 0.0
    %2183 = vmatprep.subr.mxu0 0.0
    %2184 = vmatpush1.msra.mxu0 0.0
    %2185 = vmatprep.subr.mxu0 0.0
    %2186 = vmatpush1.msra.mxu0 0.0
    %2187 = vmatprep.mubr.f32.mxu0 0.0
    %2188 = vmatmul.mubr.f32.gmra.mrb[0].mxu0 %v2118
    %v2189 = vpop.f32.mrb[0].mxu0
    %v2190 = vadd.f32 0.0, %v2189
    %v2191 = vpop.f32.mrb[0].mxu0
    %2192 = vmatprep.mubr.f32.mxu0 0.0
    %2193 = vmatmul.mubr.f32.gmra.mrb[0].mxu0 %v2121
    %v2194 = vpop.f32.mrb[0].mxu0
    %v2195 = vadd.f32 0.0, %v2194
    %v2196 = vpop.f32.mrb[0].mxu0
    %2197 = vdwg.mxu0
    %2200 = vrot.lane.b32.xlu0 %v2190, 32
    %v2201 = vpop.permute.xlu0 %2200
    %2202 = vrot.lane.b32.xlu0 %v2195, 32
    %v2203 = vpop.permute.xlu0 %2202
    %v2206 = vadd.f32 %v1996, %v2201
    %v2207 = vadd.f32 %v1997, %v2203
    %2210 = vrot.lane.b32.xlu0 %v2206, 96
    %v2211 = vpop.permute.xlu0 %2210
    %2212 = vrot.lane.b32.xlu0 %v2207, 96
    %v2213 = vpop.permute.xlu0 %2212
    %v2216 = vadd.f32 %v1066, %v2211
    %v2217 = vadd.f32 %v1067, %v2213
    %v2218 = vsel %vm58, %v2216, 0.0
    %2219 = vadd.xlane.f32.xlu0 %v2218
    %v2220 = vpop.xlane.xlu0 %2219
    %v2221 = vsel %vm58, %v2217, 0.0
    %2222 = vadd.xlane.f32.xlu0 %v2221
    %v2223 = vpop.xlane.xlu0 %2222
    %v2224 = vmul.f32 %v2220, %v65
    %v2225 = vmul.f32 %v2223, %v65
    %v2226 = vsub.f32 %v2216, %v2224
    %v2227 = vsub.f32 %v2217, %v2225
    %v2228 = vmul.f32 %v2226, %v2226
    %v2229 = vmul.f32 %v2227, %v2227
    %v2230 = vsel %vm58, %v2228, 0.0
    %2231 = vadd.xlane.f32.xlu0 %v2230
    %v2232 = vpop.xlane.xlu0 %2231
    %v2233 = vsel %vm58, %v2229, 0.0
    %2234 = vadd.xlane.f32.xlu0 %v2233
    %v2235 = vpop.xlane.xlu0 %2234
    %v2236 = vmul.f32 %v2232, %v65
    %v2237 = vmul.f32 %v2235, %v65
    %v2238 = vadd.f32 %v2236, 1e-05
    %v2239 = vadd.f32 %v2237, 1e-05
    %v2240 = vrsqrt.pop %v2238
    %v2241 = vrsqrt.pop %v2239
    %v2242 = vmul.f32 %v2226, %v2240
    %v2243 = vmul.f32 %v2227, %v2241
    %v2244 = vlaneseq
    %v2245 = vshrl.u32 %v2244, 7
    %v2246 = vsub.s32 4, %v2245
    %v2247 = vrot.slane %v39, %v2246
    %v2248 = vmul.f32 %v2242, %v2247
    %v2249 = vmul.f32 %v2243, %v2247
    %2251 = vrot.lane.b32.xlu0 %v2247, 96
    %v2252 = vpop.permute.xlu0 %2251
    %v2254 = vadd.f32 %v2248, %v2252
    %v2255 = vadd.f32 %v2249, %v2252
    %v2256 = vlaneseq
    %v2257 = vshrl.u32 %v2256, 7
    %v2258 = vsub.s32 2, %v2257
    %v2259 = vrot.slane %v39, %v2258
    %v2261 = vsel %vm58, %v2254, 0
    %v2264 = vsel %vm58, %v2255, 0
    %2266 = vmatprep.subr.mxu0 0.0
    %2267 = vmatpush1.msra.mxu0 %v31
    %2268 = vmatprep.subr.mxu0 0.0
    %2269 = vmatpush1.msra.mxu0 %v32
    %2270 = vmatprep.subr.mxu0 0.0
    %2271 = vmatpush1.msra.mxu0 %v33
    %2272 = vmatprep.subr.mxu0 0.0
    %2273 = vmatpush1.msra.mxu0 %v34
    %2274 = vmatprep.subr.mxu0 0.0
    %2275 = vmatpush1.msra.mxu0 0.0
    %2276 = vmatprep.subr.mxu0 0.0
    %2277 = vmatpush1.msra.mxu0 0.0
    %2278 = vmatprep.subr.mxu0 0.0
    %2279 = vmatpush1.msra.mxu0 0.0
    %2280 = vmatprep.subr.mxu0 0.0
    %2281 = vmatpush1.msra.mxu0 0.0
    %2282 = vmatprep.subr.mxu0 0.0
    %2283 = vmatpush1.msra.mxu0 0.0
    %2284 = vmatprep.subr.mxu0 0.0
    %2285 = vmatpush1.msra.mxu0 0.0
    %2286 = vmatprep.subr.mxu0 0.0
    %2287 = vmatpush1.msra.mxu0 0.0
    %2288 = vmatprep.subr.mxu0 0.0
    %2289 = vmatpush1.msra.mxu0 0.0
    %2290 = vmatprep.subr.mxu0 0.0
    %2291 = vmatpush1.msra.mxu0 0.0
    %2292 = vmatprep.subr.mxu0 0.0
    %2293 = vmatpush1.msra.mxu0 0.0
    %2294 = vmatprep.subr.mxu0 0.0
    %2295 = vmatpush1.msra.mxu0 0.0
    %2296 = vmatprep.subr.mxu0 0.0
    %2297 = vmatpush1.msra.mxu0 0.0
    %2298 = vmatprep.subr.mxu0 0.0
    %2299 = vmatpush1.msra.mxu0 0.0
    %2300 = vmatprep.subr.mxu0 0.0
    %2301 = vmatpush1.msra.mxu0 0.0
    %2302 = vmatprep.subr.mxu0 0.0
    %2303 = vmatpush1.msra.mxu0 0.0
    %2304 = vmatprep.subr.mxu0 0.0
    %2305 = vmatpush1.msra.mxu0 0.0
    %2306 = vmatprep.subr.mxu0 0.0
    %2307 = vmatpush1.msra.mxu0 0.0
    %2308 = vmatprep.subr.mxu0 0.0
    %2309 = vmatpush1.msra.mxu0 0.0
    %2310 = vmatprep.subr.mxu0 0.0
    %2311 = vmatpush1.msra.mxu0 0.0
    %2312 = vmatprep.subr.mxu0 0.0
    %2313 = vmatpush1.msra.mxu0 0.0
    %2314 = vmatprep.subr.mxu0 0.0
    %2315 = vmatpush1.msra.mxu0 0.0
    %2316 = vmatprep.subr.mxu0 0.0
    %2317 = vmatpush1.msra.mxu0 0.0
    %2318 = vmatprep.subr.mxu0 0.0
    %2319 = vmatpush1.msra.mxu0 0.0
    %2320 = vmatprep.subr.mxu0 0.0
    %2321 = vmatpush1.msra.mxu0 0.0
    %2322 = vmatprep.subr.mxu0 0.0
    %2323 = vmatpush1.msra.mxu0 0.0
    %2324 = vmatprep.subr.mxu0 0.0
    %2325 = vmatpush1.msra.mxu0 0.0
    %2326 = vmatprep.subr.mxu0 0.0
    %2327 = vmatpush1.msra.mxu0 0.0
    %2328 = vmatprep.subr.mxu0 0.0
    %2329 = vmatpush1.msra.mxu0 0.0
    %2330 = vmatprep.mubr.f32.mxu0 0.0
    %2331 = vmatmul.mubr.f32.gmra.mrb[0].mxu0 %v2261
    %v2332 = vpop.f32.mrb[0].mxu0
    %v2333 = vadd.f32 %v2259, %v2332
    %v2334 = vpop.f32.mrb[0].mxu0
    %2335 = vmatprep.mubr.f32.mxu0 0.0
    %2336 = vmatmul.mubr.f32.gmra.mrb[0].mxu0 %v2264
    %v2337 = vpop.f32.mrb[0].mxu0
    %v2338 = vadd.f32 %v2259, %v2337
    %v2339 = vpop.f32.mrb[0].mxu0
    %2340 = vdwg.mxu0
    %v2341 = vmax.f32 %v2333, 0.0
    %v2342 = vmax.f32 %v2338, 0.0
    %2344 = vrot.lane.b32.xlu0 %v455, 64
    %v2345 = vpop.permute.xlu0 %2344
    %2347 = vmatprep.subr.mxu0 0.0
    %2348 = vmatpush1.xpose.msra.mxu0 %v35
    %2349 = vmatprep.subr.mxu0 0.0
    %2350 = vmatpush1.xpose.msra.mxu0 %v36
    %2351 = vmatprep.subr.mxu0 0.0
    %2352 = vmatpush1.xpose.msra.mxu0 %v37
    %2353 = vmatprep.subr.mxu0 0.0
    %2354 = vmatpush1.xpose.msra.mxu0 %v38
    %2355 = vmatprep.subr.mxu0 0.0
    %2356 = vmatpush1.xpose.msra.mxu0 0.0
    %2357 = vmatprep.subr.mxu0 0.0
    %2358 = vmatpush1.xpose.msra.mxu0 0.0
    %2359 = vmatprep.subr.mxu0 0.0
    %2360 = vmatpush1.xpose.msra.mxu0 0.0
    %2361 = vmatprep.subr.mxu0 0.0
    %2362 = vmatpush1.xpose.msra.mxu0 0.0
    %2363 = vmatprep.subr.mxu0 0.0
    %2364 = vmatpush1.xpose.msra.mxu0 0.0
    %2365 = vmatprep.subr.mxu0 0.0
    %2366 = vmatpush1.xpose.msra.mxu0 0.0
    %2367 = vmatprep.subr.mxu0 0.0
    %2368 = vmatpush1.xpose.msra.mxu0 0.0
    %2369 = vmatprep.subr.mxu0 0.0
    %2370 = vmatpush1.xpose.msra.mxu0 0.0
    %2371 = vmatprep.subr.mxu0 0.0
    %2372 = vmatpush1.xpose.msra.mxu0 0.0
    %2373 = vmatprep.subr.mxu0 0.0
    %2374 = vmatpush1.xpose.msra.mxu0 0.0
    %2375 = vmatprep.subr.mxu0 0.0
    %2376 = vmatpush1.xpose.msra.mxu0 0.0
    %2377 = vmatprep.subr.mxu0 0.0
    %2378 = vmatpush1.xpose.msra.mxu0 0.0
    %2379 = vmatprep.subr.mxu0 0.0
    %2380 = vmatpush1.xpose.msra.mxu0 0.0
    %2381 = vmatprep.subr.mxu0 0.0
    %2382 = vmatpush1.xpose.msra.mxu0 0.0
    %2383 = vmatprep.subr.mxu0 0.0
    %2384 = vmatpush1.xpose.msra.mxu0 0.0
    %2385 = vmatprep.subr.mxu0 0.0
    %2386 = vmatpush1.xpose.msra.mxu0 0.0
    %2387 = vmatprep.subr.mxu0 0.0
    %2388 = vmatpush1.xpose.msra.mxu0 0.0
    %2389 = vmatprep.subr.mxu0 0.0
    %2390 = vmatpush1.xpose.msra.mxu0 0.0
    %2391 = vmatprep.subr.mxu0 0.0
    %2392 = vmatpush1.xpose.msra.mxu0 0.0
    %2393 = vmatprep.subr.mxu0 0.0
    %2394 = vmatpush1.xpose.msra.mxu0 0.0
    %2395 = vmatprep.subr.mxu0 0.0
    %2396 = vmatpush1.xpose.msra.mxu0 0.0
    %2397 = vmatprep.subr.mxu0 0.0
    %2398 = vmatpush1.xpose.msra.mxu0 0.0
    %2399 = vmatprep.subr.mxu0 0.0
    %2400 = vmatpush1.xpose.msra.mxu0 0.0
    %2401 = vmatprep.subr.mxu0 0.0
    %2402 = vmatpush1.xpose.msra.mxu0 0.0
    %2403 = vmatprep.subr.mxu0 0.0
    %2404 = vmatpush1.xpose.msra.mxu0 0.0
    %2405 = vmatprep.subr.mxu0 0.0
    %2406 = vmatpush1.xpose.msra.mxu0 0.0
    %2407 = vmatprep.subr.mxu0 0.0
    %2408 = vmatpush1.xpose.msra.mxu0 0.0
    %2409 = vmatprep.subr.mxu0 0.0
    %2410 = vmatpush1.xpose.msra.mxu0 0.0
    %2411 = vmatprep.mubr.f32.mxu0 0.0
    %2412 = vmatmul.mubr.f32.gmra.mrb[0].mxu0 %v2341
    %v2413 = vpop.f32.mrb[0].mxu0
    %v2414 = vadd.f32 %v2345, %v2413
    %v2415 = vpop.f32.mrb[0].mxu0
    %2416 = vmatprep.mubr.f32.mxu0 0.0
    %2417 = vmatmul.mubr.f32.gmra.mrb[0].mxu0 %v2342
    %v2418 = vpop.f32.mrb[0].mxu0
    %v2419 = vadd.f32 %v2345, %v2418
    %v2420 = vpop.f32.mrb[0].mxu0
    %2421 = vdwg.mxu0
    %v2422 = vadd.f32 %v2216, %v2414
    %v2423 = vadd.f32 %v2217, %v2419
    %2424 = vst.msk [vmem:[#allocation2] sm:$0xff] %vm58, %v2422
    %2425 = vst.msk [vmem:[#allocation2 + $0x8] sm:$0xff] %vm58, %v2423
    // Predicated region
    $region14: #{decoder_forward.1} parent=1 // pred_check
      _
    $region15: #{decoder_forward.1} parent=1 // pred_check_branch
      %2427 = sbr.rel (0) target = $region17
    $region16: #{decoder_forward.1} parent=1 // pred_region
      %s2429 = ssub.s32 256, 256
      %2430 = vsyncadd [#allocation3], %s2429
      %s2431 = sshll.u32 [#allocation2], 4
      %s2432 = int_to_ptr.vmem [resolvable:$true] %s2431
      %2437 = dma.vmem_to_hbm [thread:$0]  %s2432, 256, %s3, [#allocation3], 128, 128, 8
    $region17: #{decoder_forward.1} parent=1 // pred_fallthru
      _
    // Predicated region
    $region18: #{decoder_forward.1} parent=1 // pred_check
      _
    $region19: #{decoder_forward.1} parent=1 // pred_check_branch
      %2439 = sbr.rel (0) target = $region21
    $region20: #{decoder_forward.1} parent=1 // pred_region
      %2440 = dma.done [#allocation3], 256
    $region21: #{decoder_forward.1} parent=1 // pred_fallthru
      _
    %2441 = vsyncpa [#allocation3], 1

</llo_original>
